<compile_context>
chip_gen: v7x
topology: tpu7x:2x2x1
jax: 0.10.0
libtpu: 0.0.40
codegen_flags: <defaults>
</compile_context>

<pallas_src>
import functools

import jax
import jax.numpy as jnp
from jax.experimental import pallas as pl
from jax.experimental.pallas import tpu as pltpu

MIN_VALUE = -9999.0   # stand-in for config.MIN_VALUE ("no edge" marker in adj_matrix)
BN_EPS = 1e-5


def _dag_kernel(num_res, num_tar,
                x_ref, loc_ref, nx_ref, nl_ref,
                w1a_ref, w1b_ref, b1_ref,
                w2_ref, b2_ref,
                w3_ref, b3_ref,
                gamma_ref, beta_ref, negmask_ref,
                out_ref):
    T = num_tar
    mdt = w1a_ref.dtype        # matmul-input dtype (f32 or bf16); accumulation is f32

    # ---- fused "noiser" + concat: instead of concatenating/flattening, W1 is
    #      pre-split into its x-block and loc-block and the two dots are summed.
    xa = x_ref[...] + nx_ref[...]            # (B, 16*T) f32
    xb = loc_ref[...] + nl_ref[...]          # (B, R*T)  f32

    # ---- l1 + ReLU ----
    h1 = jnp.dot(xa.astype(mdt), w1a_ref[...], preferred_element_type=jnp.float32)
    h1 = h1 + jnp.dot(xb.astype(mdt), w1b_ref[...], preferred_element_type=jnp.float32)
    h1 = jnp.maximum(h1 + b1_ref[...], 0.0)  # (B, 18*T)

    # ---- l2 + ReLU ----
    h2 = jnp.dot(h1.astype(mdt), w2_ref[...], preferred_element_type=jnp.float32)
    h2 = jnp.maximum(h2 + b2_ref[...], 0.0)  # (B, 14*T)

    # ---- l3 as a single (B,14T)@(14T,R*T) dot; per-resource rows are the R
    #      contiguous lane chunks of width T (no reshape / concat needed). ----
    y3 = jnp.dot(h2.astype(mdt), w3_ref[...], preferred_element_type=jnp.float32)
    y3 = y3 + b3_ref[...]                    # (B, R*T)
    ys = [y3[:, r * T:(r + 1) * T] for r in range(num_res)]   # R x (B, T)

    # ---- BatchNorm1d(T): per-sample training-mode stats over the R rows ----
    mean = ys[0]
    for yr in ys[1:]:
        mean = mean + yr
    mean = mean * (1.0 / num_res)
    var = (ys[0] - mean) ** 2
    for yr in ys[1:]:
        var = var + (yr - mean) ** 2
    var = var * (1.0 / num_res)              # biased variance (matches BatchNorm)
    inv_std = jax.lax.rsqrt(var + BN_EPS)
    gamma = gamma_ref[...]
    beta = beta_ref[...]

    loc = loc_ref[...]                       # (B, R*T) one-hot resource rows (f32)
    for r in range(num_res):
        yn = gamma * (ys[r] - mean) * inv_std + beta          # (B, T)
        # create_mask: the one-hot loc row picks the pre-negated adjacency row,
        # i.e. the additive {0, -9999} mask, via one tiny matmul.
        add_mask = jnp.dot(loc[:, r * T:(r + 1) * T], negmask_ref[...],
                           preferred_element_type=jnp.float32)  # (B, T)
        # masked softmax over targets
        z = yn + add_mask
        z = z - jnp.max(z, axis=1, keepdims=True)
        e = jnp.exp(z)
        denom = jnp.sum(e, axis=1, keepdims=True)
        out_ref[:, r * T:(r + 1) * T] = e * pl.reciprocal(denom, approx=True)


def prep_params(params, adj_matrix, num_tar, num_res, mat_dtype=jnp.float32):
    """One-time parameter prep (hoisted out of the per-step call): split W1 into
    its x / loc blocks, reshape biases & BN params to (1, n), pre-negate the
    adjacency mask, and optionally cast matmul weights to bf16 (MXU inputs)."""
    w1t, b1, w2t, b2, w3t, b3, gamma, beta = params
    nx = 16 * num_tar
    negmask = jnp.where(adj_matrix != MIN_VALUE, 0.0, MIN_VALUE).astype(jnp.float32)
    return (
        w1t[:nx, :].astype(mat_dtype),             # (16T, 18T)  x-block of W1
        w1t[nx:, :].astype(mat_dtype),             # (R*T, 18T)  loc-block of W1
        b1.reshape(1, -1).astype(jnp.float32),
        w2t.astype(mat_dtype),                     # (18T, 14T)
        b2.reshape(1, -1).astype(jnp.float32),
        w3t.astype(mat_dtype),                     # (14T, R*T)
        b3.reshape(1, -1).astype(jnp.float32),
        gamma.reshape(1, -1).astype(jnp.float32),  # BN weight
        beta.reshape(1, -1).astype(jnp.float32),   # BN bias
        negmask,                                   # (T, T) additive mask matrix
    )


def def_action_generator_batched(x, def_cur_loc, prepped, noise_x, noise_l):
    """B independent module forwards in one pallas_call.
    x: (B, 16, T) f32, def_cur_loc: (B, R, T) one-hot f32,
    noise_*: the N(0,1) "noiser" samples.  Returns (B, R, T) distributions."""
    B, num_res, num_tar = def_cur_loc.shape
    # Contiguous reshapes only (row-major flatten, same ordering as torch .view)
    x_flat = x.reshape(B, 16 * num_tar)
    loc_flat = def_cur_loc.reshape(B, num_res * num_tar)
    noise_x = noise_x.reshape(B, 16 * num_tar)
    noise_l = noise_l.reshape(B, num_res * num_tar)

    vmem = pl.BlockSpec(memory_space=pltpu.MemorySpace.VMEM)
    kernel = functools.partial(_dag_kernel, num_res, num_tar)
    out = pl.pallas_call(
        kernel,
        out_shape=jax.ShapeDtypeStruct((B, num_res * num_tar), jnp.float32),
        in_specs=[vmem] * 14,
        out_specs=vmem,
    )(x_flat, loc_flat, noise_x, noise_l, *prepped)
    return out.reshape(B, num_res, num_tar)


def def_action_generator(x, def_cur_loc, prepped, noise_x, noise_l):
    """Single-sample forward matching the PyTorch module signature (B=1 path)."""
    out = def_action_generator_batched(x[None], def_cur_loc[None], prepped,
                                       noise_x[None], noise_l[None])
    return out[0]


def reference_single(x, def_cur_loc, adj_matrix, params, noise_x, noise_l,
                     mat_dtype=jnp.float32):
    """Pure-JAX mirror of the PyTorch forward (same noise, same matmul dtype)."""
    w1t, b1, w2t, b2, w3t, b3, gamma, beta = params
    num_res, num_tar = def_cur_loc.shape

    def mm(a, w):
        return jnp.dot(a.astype(mat_dtype), w.astype(mat_dtype),
                       preferred_element_type=jnp.float32)

    xin = jnp.concatenate([x.reshape(-1) + noise_x.reshape(-1),
                           def_cur_loc.reshape(-1) + noise_l.reshape(-1)])
    h1 = jax.nn.relu(mm(xin, w1t) + b1)
    h2 = jax.nn.relu(mm(h1, w2t) + b2)
    y = (mm(h2, w3t) + b3).reshape(num_res, num_tar)
    mean = jnp.mean(y, axis=0, keepdims=True)
    var = jnp.mean((y - mean) ** 2, axis=0, keepdims=True)
    y = gamma * (y - mean) / jnp.sqrt(var + BN_EPS) + beta
    valid = (adj_matrix != MIN_VALUE).astype(jnp.float32)
    reach = def_cur_loc @ valid
    add_mask = jnp.where(reach > 0.0, 0.0, MIN_VALUE)
    return jax.nn.softmax(y + add_mask, axis=1)


def make_params(key, num_tar, num_res):
    d0 = (16 + num_res) * num_tar
    d1 = 18 * num_tar
    d2 = 14 * num_tar
    d3 = num_tar * num_res
    ks = jax.random.split(key, 6)
    # weights stored as (in, out); PyTorch stores (out, in) and applies W^T
    w1t = jax.random.normal(ks[0], (d0, d1), jnp.float32) * 0.05
    b1 = jax.random.normal(ks[1], (d1,), jnp.float32) * 0.05
    w2t = jax.random.normal(ks[2], (d1, d2), jnp.float32) * 0.05
    b2 = jax.random.normal(ks[3], (d2,), jnp.float32) * 0.05
    w3t = jax.random.normal(ks[4], (d2, d3), jnp.float32) * 0.05
    b3 = jax.random.normal(ks[5], (d3,), jnp.float32) * 0.05
    gamma = jnp.ones((num_tar,), jnp.float32)   # BatchNorm1d default weight
    beta = jnp.zeros((num_tar,), jnp.float32)   # BatchNorm1d default bias
    return (w1t, b1, w2t, b2, w3t, b3, gamma, beta)


if __name__ == "__main__":
    num_tar, num_res, batch = 10, 5, 8

    root = jax.random.PRNGKey(0)
    k_x, k_param, k_nx, k_nl = jax.random.split(root, 4)

    # batch of inputs: each batch element is one module forward
    x = jax.random.normal(k_x, (batch, 16, num_tar), jnp.float32)

    # one-hot current locations of the num_res defender resources (per sample)
    pos = (jnp.arange(batch)[:, None] + 2 * jnp.arange(num_res)[None, :]) % num_tar
    def_cur_loc = jax.nn.one_hot(pos, num_tar, dtype=jnp.float32)   # (B, R, T)

    # ring adjacency: edge iff circular distance <= 1, otherwise MIN_VALUE
    idx = jnp.arange(num_tar)
    d = jnp.abs(idx[:, None] - idx[None, :])
    ring = jnp.minimum(d, num_tar - d)
    adj_matrix = jnp.where(ring <= 1, 1.0, MIN_VALUE).astype(jnp.float32)

    params = make_params(k_param, num_tar, num_res)

    # the "noiser" N(0,1) samples (same arrays fed to kernel and reference)
    noise_x = jax.random.normal(k_nx, (batch, 16 * num_tar), jnp.float32)
    noise_l = jax.random.normal(k_nl, (batch, num_res * num_tar), jnp.float32)

    # ---- f32-weight path: fidelity check against the module semantics ----
    prepped_f32 = prep_params(params, adj_matrix, num_tar, num_res, jnp.float32)
    out_f32 = jax.block_until_ready(
        def_action_generator_batched(x, def_cur_loc, prepped_f32, noise_x, noise_l))
    ref_f32 = jax.vmap(
        lambda xb, lb, nxb, nlb: reference_single(xb, lb, adj_matrix, params, nxb, nlb)
    )(x, def_cur_loc, noise_x, noise_l)
    assert out_f32.shape == (batch, num_res, num_tar)
    assert jnp.allclose(out_f32, ref_f32, atol=5e-3, rtol=5e-3), "f32 mismatch vs reference"
    assert jnp.allclose(jnp.sum(out_f32, axis=-1), 1.0, atol=5e-3), "rows must sum to 1"
    reach = jnp.einsum("brt,ts->brs", def_cur_loc,
                       (adj_matrix != MIN_VALUE).astype(jnp.float32))
    assert jnp.max(jnp.where(reach > 0.0, 0.0, out_f32)) < 1e-6, "mask leaked probability"

    # ---- bf16-weight path (recommended perf config), checked against a
    #      reference using the same bf16 matmul inputs ----
    prepped_bf16 = prep_params(params, adj_matrix, num_tar, num_res, jnp.bfloat16)
    out_bf16 = jax.block_until_ready(
        def_action_generator_batched(x, def_cur_loc, prepped_bf16, noise_x, noise_l))
    ref_bf16 = jax.vmap(
        lambda xb, lb, nxb, nlb: reference_single(xb, lb, adj_matrix, params, nxb, nlb,
                                                  mat_dtype=jnp.bfloat16)
    )(x, def_cur_loc, noise_x, noise_l)
    assert jnp.allclose(out_bf16, ref_bf16, atol=2e-2, rtol=2e-2), "bf16 mismatch"
    assert jnp.allclose(jnp.sum(out_bf16, axis=-1), 1.0, atol=5e-3)

    # ---- single-sample path matching the original module signature ----
    out_one = jax.block_until_ready(
        def_action_generator(x[0], def_cur_loc[0], prepped_f32, noise_x[0], noise_l[0]))
    assert jnp.allclose(out_one, ref_f32[0], atol=5e-3, rtol=5e-3)

    print("KERNEL_OK")
</pallas_src>

<mosaic_0001>
module attributes {stable_mosaic.version = 11 : i64} {
  func.func @_dag_kernel(%arg0: memref<8x160xf32, #tpu.memory_space<vmem>>, %arg1: memref<8x50xf32, #tpu.memory_space<vmem>>, %arg2: memref<8x160xf32, #tpu.memory_space<vmem>>, %arg3: memref<8x50xf32, #tpu.memory_space<vmem>>, %arg4: memref<160x180xf32, #tpu.memory_space<vmem>>, %arg5: memref<50x180xf32, #tpu.memory_space<vmem>>, %arg6: memref<1x180xf32, #tpu.memory_space<vmem>>, %arg7: memref<180x140xf32, #tpu.memory_space<vmem>>, %arg8: memref<1x140xf32, #tpu.memory_space<vmem>>, %arg9: memref<140x50xf32, #tpu.memory_space<vmem>>, %arg10: memref<1x50xf32, #tpu.memory_space<vmem>>, %arg11: memref<1x10xf32, #tpu.memory_space<vmem>>, %arg12: memref<1x10xf32, #tpu.memory_space<vmem>>, %arg13: memref<10x10xf32, #tpu.memory_space<vmem>>, %arg14: memref<8x50xf32, #tpu.memory_space<vmem>>) attributes {dimension_semantics = [], scalar_prefetch = 0 : i64, scratch_operands = 0 : i64, tpu.core_type = #tpu.core_type<tc>} {
    %c0 = arith.constant 0 : index
    %c0_0 = arith.constant 0 : index
    %0 = vector.load %arg0[%c0, %c0_0] : memref<8x160xf32, #tpu.memory_space<vmem>>, vector<8x160xf32>
    %c0_1 = arith.constant 0 : index
    %c0_2 = arith.constant 0 : index
    %1 = vector.load %arg2[%c0_1, %c0_2] : memref<8x160xf32, #tpu.memory_space<vmem>>, vector<8x160xf32>
    %2 = arith.addf %0, %1 : vector<8x160xf32>
    %c0_3 = arith.constant 0 : index
    %c0_4 = arith.constant 0 : index
    %3 = vector.load %arg1[%c0_3, %c0_4] : memref<8x50xf32, #tpu.memory_space<vmem>>, vector<8x50xf32>
    %c0_5 = arith.constant 0 : index
    %c0_6 = arith.constant 0 : index
    %4 = vector.load %arg3[%c0_5, %c0_6] : memref<8x50xf32, #tpu.memory_space<vmem>>, vector<8x50xf32>
    %5 = arith.addf %3, %4 : vector<8x50xf32>
    %c0_7 = arith.constant 0 : index
    %c0_8 = arith.constant 0 : index
    %6 = vector.load %arg4[%c0_7, %c0_8] : memref<160x180xf32, #tpu.memory_space<vmem>>, vector<160x180xf32>
    %cst = arith.constant dense<0.000000e+00> : vector<8x180xf32>
    %7 = tpu.matmul %2, %6, %cst {dimension_numbers = #tpu.dot_dimension_numbers<[1], [0], [0], [1], [0, 0, 1, 1], [], []>} : vector<8x160xf32>, vector<160x180xf32>, vector<8x180xf32> -> vector<8x180xf32>
    %c0_9 = arith.constant 0 : index
    %c0_10 = arith.constant 0 : index
    %8 = vector.load %arg5[%c0_9, %c0_10] : memref<50x180xf32, #tpu.memory_space<vmem>>, vector<50x180xf32>
    %cst_11 = arith.constant dense<0.000000e+00> : vector<8x180xf32>
    %9 = tpu.matmul %5, %8, %cst_11 {dimension_numbers = #tpu.dot_dimension_numbers<[1], [0], [0], [1], [0, 0, 1, 1], [], []>} : vector<8x50xf32>, vector<50x180xf32>, vector<8x180xf32> -> vector<8x180xf32>
    %10 = arith.addf %7, %9 : vector<8x180xf32>
    %c0_12 = arith.constant 0 : index
    %c0_13 = arith.constant 0 : index
    %11 = vector.load %arg6[%c0_12, %c0_13] : memref<1x180xf32, #tpu.memory_space<vmem>>, vector<1x180xf32>
    %12 = vector.broadcast %11 : vector<1x180xf32> to vector<8x180xf32>
    %13 = arith.addf %10, %12 : vector<8x180xf32>
    %cst_14 = arith.constant 0.000000e+00 : f32
    %14 = vector.broadcast %cst_14 : f32 to vector<8x180xf32>
    %15 = arith.maximumf %13, %14 : vector<8x180xf32>
    %c0_15 = arith.constant 0 : index
    %c0_16 = arith.constant 0 : index
    %16 = vector.load %arg7[%c0_15, %c0_16] : memref<180x140xf32, #tpu.memory_space<vmem>>, vector<180x140xf32>
    %cst_17 = arith.constant dense<0.000000e+00> : vector<8x140xf32>
    %17 = tpu.matmul %15, %16, %cst_17 {dimension_numbers = #tpu.dot_dimension_numbers<[1], [0], [0], [1], [0, 0, 1, 1], [], []>} : vector<8x180xf32>, vector<180x140xf32>, vector<8x140xf32> -> vector<8x140xf32>
    %c0_18 = arith.constant 0 : index
    %c0_19 = arith.constant 0 : index
    %18 = vector.load %arg8[%c0_18, %c0_19] : memref<1x140xf32, #tpu.memory_space<vmem>>, vector<1x140xf32>
    %19 = vector.broadcast %18 : vector<1x140xf32> to vector<8x140xf32>
    %20 = arith.addf %17, %19 : vector<8x140xf32>
    %cst_20 = arith.constant 0.000000e+00 : f32
    %21 = vector.broadcast %cst_20 : f32 to vector<8x140xf32>
    %22 = arith.maximumf %20, %21 : vector<8x140xf32>
    %c0_21 = arith.constant 0 : index
    %c0_22 = arith.constant 0 : index
    %23 = vector.load %arg9[%c0_21, %c0_22] : memref<140x50xf32, #tpu.memory_space<vmem>>, vector<140x50xf32>
    %cst_23 = arith.constant dense<0.000000e+00> : vector<8x50xf32>
    %24 = tpu.matmul %22, %23, %cst_23 {dimension_numbers = #tpu.dot_dimension_numbers<[1], [0], [0], [1], [0, 0, 1, 1], [], []>} : vector<8x140xf32>, vector<140x50xf32>, vector<8x50xf32> -> vector<8x50xf32>
    %c0_24 = arith.constant 0 : index
    %c0_25 = arith.constant 0 : index
    %25 = vector.load %arg10[%c0_24, %c0_25] : memref<1x50xf32, #tpu.memory_space<vmem>>, vector<1x50xf32>
    %26 = vector.broadcast %25 : vector<1x50xf32> to vector<8x50xf32>
    %27 = arith.addf %24, %26 : vector<8x50xf32>
    %28 = vector.extract_strided_slice %27 {offsets = [0, 0], sizes = [8, 10], strides = [1, 1]} : vector<8x50xf32> to vector<8x10xf32>
    %29 = vector.extract_strided_slice %27 {offsets = [0, 10], sizes = [8, 10], strides = [1, 1]} : vector<8x50xf32> to vector<8x10xf32>
    %30 = vector.extract_strided_slice %27 {offsets = [0, 20], sizes = [8, 10], strides = [1, 1]} : vector<8x50xf32> to vector<8x10xf32>
    %31 = vector.extract_strided_slice %27 {offsets = [0, 30], sizes = [8, 10], strides = [1, 1]} : vector<8x50xf32> to vector<8x10xf32>
    %32 = vector.extract_strided_slice %27 {offsets = [0, 40], sizes = [8, 10], strides = [1, 1]} : vector<8x50xf32> to vector<8x10xf32>
    %33 = arith.addf %28, %29 : vector<8x10xf32>
    %34 = arith.addf %33, %30 : vector<8x10xf32>
    %35 = arith.addf %34, %31 : vector<8x10xf32>
    %36 = arith.addf %35, %32 : vector<8x10xf32>
    %cst_26 = arith.constant 2.000000e-01 : f32
    %37 = vector.broadcast %cst_26 : f32 to vector<8x10xf32>
    %38 = arith.mulf %36, %37 : vector<8x10xf32>
    %39 = arith.subf %28, %38 : vector<8x10xf32>
    %40 = arith.mulf %39, %39 : vector<8x10xf32>
    %41 = arith.subf %29, %38 : vector<8x10xf32>
    %42 = arith.mulf %41, %41 : vector<8x10xf32>
    %43 = arith.addf %40, %42 : vector<8x10xf32>
    %44 = arith.subf %30, %38 : vector<8x10xf32>
    %45 = arith.mulf %44, %44 : vector<8x10xf32>
    %46 = arith.addf %43, %45 : vector<8x10xf32>
    %47 = arith.subf %31, %38 : vector<8x10xf32>
    %48 = arith.mulf %47, %47 : vector<8x10xf32>
    %49 = arith.addf %46, %48 : vector<8x10xf32>
    %50 = arith.subf %32, %38 : vector<8x10xf32>
    %51 = arith.mulf %50, %50 : vector<8x10xf32>
    %52 = arith.addf %49, %51 : vector<8x10xf32>
    %cst_27 = arith.constant 2.000000e-01 : f32
    %53 = vector.broadcast %cst_27 : f32 to vector<8x10xf32>
    %54 = arith.mulf %52, %53 : vector<8x10xf32>
    %cst_28 = arith.constant 9.99999974E-6 : f32
    %55 = vector.broadcast %cst_28 : f32 to vector<8x10xf32>
    %56 = arith.addf %54, %55 : vector<8x10xf32>
    %57 = math.rsqrt %56 : vector<8x10xf32>
    %c0_29 = arith.constant 0 : index
    %c0_30 = arith.constant 0 : index
    %58 = vector.load %arg11[%c0_29, %c0_30] : memref<1x10xf32, #tpu.memory_space<vmem>>, vector<1x10xf32>
    %c0_31 = arith.constant 0 : index
    %c0_32 = arith.constant 0 : index
    %59 = vector.load %arg12[%c0_31, %c0_32] : memref<1x10xf32, #tpu.memory_space<vmem>>, vector<1x10xf32>
    %c0_33 = arith.constant 0 : index
    %c0_34 = arith.constant 0 : index
    %60 = vector.load %arg1[%c0_33, %c0_34] : memref<8x50xf32, #tpu.memory_space<vmem>>, vector<8x50xf32>
    %61 = arith.subf %28, %38 : vector<8x10xf32>
    %62 = vector.broadcast %58 : vector<1x10xf32> to vector<8x10xf32>
    %63 = arith.mulf %62, %61 : vector<8x10xf32>
    %64 = arith.mulf %63, %57 : vector<8x10xf32>
    %65 = vector.broadcast %59 : vector<1x10xf32> to vector<8x10xf32>
    %66 = arith.addf %64, %65 : vector<8x10xf32>
    %67 = vector.extract_strided_slice %60 {offsets = [0, 0], sizes = [8, 10], strides = [1, 1]} : vector<8x50xf32> to vector<8x10xf32>
    %c0_35 = arith.constant 0 : index
    %c0_36 = arith.constant 0 : index
    %68 = vector.load %arg13[%c0_35, %c0_36] : memref<10x10xf32, #tpu.memory_space<vmem>>, vector<10x10xf32>
    %cst_37 = arith.constant dense<0.000000e+00> : vector<8x10xf32>
    %69 = tpu.matmul %67, %68, %cst_37 {dimension_numbers = #tpu.dot_dimension_numbers<[1], [0], [0], [1], [0, 0, 1, 1], [], []>} : vector<8x10xf32>, vector<10x10xf32>, vector<8x10xf32> -> vector<8x10xf32>
    %70 = arith.addf %66, %69 : vector<8x10xf32>
    %cst_38 = arith.constant dense<0xFF800000> : vector<8xf32>
    %71 = vector.multi_reduction <maximumf>, %70, %cst_38 [1] : vector<8x10xf32> to vector<8xf32>
    %72 = vector.shape_cast %71 : vector<8xf32> to vector<8x1xf32>
    %73 = vector.broadcast %72 : vector<8x1xf32> to vector<8x10xf32>
    %74 = arith.subf %70, %73 : vector<8x10xf32>
    %75 = math.exp %74 : vector<8x10xf32>
    %cst_39 = arith.constant dense<0.000000e+00> : vector<8xf32>
    %76 = vector.multi_reduction <add>, %75, %cst_39 [1] : vector<8x10xf32> to vector<8xf32>
    %77 = vector.shape_cast %76 : vector<8xf32> to vector<8x1xf32>
    %78 = tpu.reciprocal %77 {approx = true} : vector<8x1xf32> -> vector<8x1xf32>
    %79 = vector.broadcast %78 : vector<8x1xf32> to vector<8x10xf32>
    %80 = arith.mulf %75, %79 : vector<8x10xf32>
    %c0_40 = arith.constant 0 : index
    %c0_41 = arith.constant 0 : index
    %81 = vector.load %arg14[%c0_40, %c0_41] : memref<8x50xf32, #tpu.memory_space<vmem>>, vector<8x10xf32>
    tpu.vector_store %arg14[%c0_40, %c0_41], %80 {strides = array<i32>} : memref<8x50xf32, #tpu.memory_space<vmem>>, vector<8x10xf32>,
    %82 = arith.subf %29, %38 : vector<8x10xf32>
    %83 = vector.broadcast %58 : vector<1x10xf32> to vector<8x10xf32>
    %84 = arith.mulf %83, %82 : vector<8x10xf32>
    %85 = arith.mulf %84, %57 : vector<8x10xf32>
    %86 = vector.broadcast %59 : vector<1x10xf32> to vector<8x10xf32>
    %87 = arith.addf %85, %86 : vector<8x10xf32>
    %88 = vector.extract_strided_slice %60 {offsets = [0, 10], sizes = [8, 10], strides = [1, 1]} : vector<8x50xf32> to vector<8x10xf32>
    %c0_42 = arith.constant 0 : index
    %c0_43 = arith.constant 0 : index
    %89 = vector.load %arg13[%c0_42, %c0_43] : memref<10x10xf32, #tpu.memory_space<vmem>>, vector<10x10xf32>
    %cst_44 = arith.constant dense<0.000000e+00> : vector<8x10xf32>
    %90 = tpu.matmul %88, %89, %cst_44 {dimension_numbers = #tpu.dot_dimension_numbers<[1], [0], [0], [1], [0, 0, 1, 1], [], []>} : vector<8x10xf32>, vector<10x10xf32>, vector<8x10xf32> -> vector<8x10xf32>
    %91 = arith.addf %87, %90 : vector<8x10xf32>
    %cst_45 = arith.constant dense<0xFF800000> : vector<8xf32>
    %92 = vector.multi_reduction <maximumf>, %91, %cst_45 [1] : vector<8x10xf32> to vector<8xf32>
    %93 = vector.shape_cast %92 : vector<8xf32> to vector<8x1xf32>
    %94 = vector.broadcast %93 : vector<8x1xf32> to vector<8x10xf32>
    %95 = arith.subf %91, %94 : vector<8x10xf32>
    %96 = math.exp %95 : vector<8x10xf32>
    %cst_46 = arith.constant dense<0.000000e+00> : vector<8xf32>
    %97 = vector.multi_reduction <add>, %96, %cst_46 [1] : vector<8x10xf32> to vector<8xf32>
    %98 = vector.shape_cast %97 : vector<8xf32> to vector<8x1xf32>
    %99 = tpu.reciprocal %98 {approx = true} : vector<8x1xf32> -> vector<8x1xf32>
    %100 = vector.broadcast %99 : vector<8x1xf32> to vector<8x10xf32>
    %101 = arith.mulf %96, %100 : vector<8x10xf32>
    %c0_47 = arith.constant 0 : index
    %c10 = arith.constant 10 : index
    %102 = vector.load %arg14[%c0_47, %c10] : memref<8x50xf32, #tpu.memory_space<vmem>>, vector<8x10xf32>
    tpu.vector_store %arg14[%c0_47, %c10], %101 {strides = array<i32>} : memref<8x50xf32, #tpu.memory_space<vmem>>, vector<8x10xf32>,
    %103 = arith.subf %30, %38 : vector<8x10xf32>
    %104 = vector.broadcast %58 : vector<1x10xf32> to vector<8x10xf32>
    %105 = arith.mulf %104, %103 : vector<8x10xf32>
    %106 = arith.mulf %105, %57 : vector<8x10xf32>
    %107 = vector.broadcast %59 : vector<1x10xf32> to vector<8x10xf32>
    %108 = arith.addf %106, %107 : vector<8x10xf32>
    %109 = vector.extract_strided_slice %60 {offsets = [0, 20], sizes = [8, 10], strides = [1, 1]} : vector<8x50xf32> to vector<8x10xf32>
    %c0_48 = arith.constant 0 : index
    %c0_49 = arith.constant 0 : index
    %110 = vector.load %arg13[%c0_48, %c0_49] : memref<10x10xf32, #tpu.memory_space<vmem>>, vector<10x10xf32>
    %cst_50 = arith.constant dense<0.000000e+00> : vector<8x10xf32>
    %111 = tpu.matmul %109, %110, %cst_50 {dimension_numbers = #tpu.dot_dimension_numbers<[1], [0], [0], [1], [0, 0, 1, 1], [], []>} : vector<8x10xf32>, vector<10x10xf32>, vector<8x10xf32> -> vector<8x10xf32>
    %112 = arith.addf %108, %111 : vector<8x10xf32>
    %cst_51 = arith.constant dense<0xFF800000> : vector<8xf32>
    %113 = vector.multi_reduction <maximumf>, %112, %cst_51 [1] : vector<8x10xf32> to vector<8xf32>
    %114 = vector.shape_cast %113 : vector<8xf32> to vector<8x1xf32>
    %115 = vector.broadcast %114 : vector<8x1xf32> to vector<8x10xf32>
    %116 = arith.subf %112, %115 : vector<8x10xf32>
    %117 = math.exp %116 : vector<8x10xf32>
    %cst_52 = arith.constant dense<0.000000e+00> : vector<8xf32>
    %118 = vector.multi_reduction <add>, %117, %cst_52 [1] : vector<8x10xf32> to vector<8xf32>
    %119 = vector.shape_cast %118 : vector<8xf32> to vector<8x1xf32>
    %120 = tpu.reciprocal %119 {approx = true} : vector<8x1xf32> -> vector<8x1xf32>
    %121 = vector.broadcast %120 : vector<8x1xf32> to vector<8x10xf32>
    %122 = arith.mulf %117, %121 : vector<8x10xf32>
    %c0_53 = arith.constant 0 : index
    %c20 = arith.constant 20 : index
    %123 = vector.load %arg14[%c0_53, %c20] : memref<8x50xf32, #tpu.memory_space<vmem>>, vector<8x10xf32>
    tpu.vector_store %arg14[%c0_53, %c20], %122 {strides = array<i32>} : memref<8x50xf32, #tpu.memory_space<vmem>>, vector<8x10xf32>,
    %124 = arith.subf %31, %38 : vector<8x10xf32>
    %125 = vector.broadcast %58 : vector<1x10xf32> to vector<8x10xf32>
    %126 = arith.mulf %125, %124 : vector<8x10xf32>
    %127 = arith.mulf %126, %57 : vector<8x10xf32>
    %128 = vector.broadcast %59 : vector<1x10xf32> to vector<8x10xf32>
    %129 = arith.addf %127, %128 : vector<8x10xf32>
    %130 = vector.extract_strided_slice %60 {offsets = [0, 30], sizes = [8, 10], strides = [1, 1]} : vector<8x50xf32> to vector<8x10xf32>
    %c0_54 = arith.constant 0 : index
    %c0_55 = arith.constant 0 : index
    %131 = vector.load %arg13[%c0_54, %c0_55] : memref<10x10xf32, #tpu.memory_space<vmem>>, vector<10x10xf32>
    %cst_56 = arith.constant dense<0.000000e+00> : vector<8x10xf32>
    %132 = tpu.matmul %130, %131, %cst_56 {dimension_numbers = #tpu.dot_dimension_numbers<[1], [0], [0], [1], [0, 0, 1, 1], [], []>} : vector<8x10xf32>, vector<10x10xf32>, vector<8x10xf32> -> vector<8x10xf32>
    %133 = arith.addf %129, %132 : vector<8x10xf32>
    %cst_57 = arith.constant dense<0xFF800000> : vector<8xf32>
    %134 = vector.multi_reduction <maximumf>, %133, %cst_57 [1] : vector<8x10xf32> to vector<8xf32>
    %135 = vector.shape_cast %134 : vector<8xf32> to vector<8x1xf32>
    %136 = vector.broadcast %135 : vector<8x1xf32> to vector<8x10xf32>
    %137 = arith.subf %133, %136 : vector<8x10xf32>
    %138 = math.exp %137 : vector<8x10xf32>
    %cst_58 = arith.constant dense<0.000000e+00> : vector<8xf32>
    %139 = vector.multi_reduction <add>, %138, %cst_58 [1] : vector<8x10xf32> to vector<8xf32>
    %140 = vector.shape_cast %139 : vector<8xf32> to vector<8x1xf32>
    %141 = tpu.reciprocal %140 {approx = true} : vector<8x1xf32> -> vector<8x1xf32>
    %142 = vector.broadcast %141 : vector<8x1xf32> to vector<8x10xf32>
    %143 = arith.mulf %138, %142 : vector<8x10xf32>
    %c0_59 = arith.constant 0 : index
    %c30 = arith.constant 30 : index
    %144 = vector.load %arg14[%c0_59, %c30] : memref<8x50xf32, #tpu.memory_space<vmem>>, vector<8x10xf32>
    tpu.vector_store %arg14[%c0_59, %c30], %143 {strides = array<i32>} : memref<8x50xf32, #tpu.memory_space<vmem>>, vector<8x10xf32>,
    %145 = arith.subf %32, %38 : vector<8x10xf32>
    %146 = vector.broadcast %58 : vector<1x10xf32> to vector<8x10xf32>
    %147 = arith.mulf %146, %145 : vector<8x10xf32>
    %148 = arith.mulf %147, %57 : vector<8x10xf32>
    %149 = vector.broadcast %59 : vector<1x10xf32> to vector<8x10xf32>
    %150 = arith.addf %148, %149 : vector<8x10xf32>
    %151 = vector.extract_strided_slice %60 {offsets = [0, 40], sizes = [8, 10], strides = [1, 1]} : vector<8x50xf32> to vector<8x10xf32>
    %c0_60 = arith.constant 0 : index
    %c0_61 = arith.constant 0 : index
    %152 = vector.load %arg13[%c0_60, %c0_61] : memref<10x10xf32, #tpu.memory_space<vmem>>, vector<10x10xf32>
    %cst_62 = arith.constant dense<0.000000e+00> : vector<8x10xf32>
    %153 = tpu.matmul %151, %152, %cst_62 {dimension_numbers = #tpu.dot_dimension_numbers<[1], [0], [0], [1], [0, 0, 1, 1], [], []>} : vector<8x10xf32>, vector<10x10xf32>, vector<8x10xf32> -> vector<8x10xf32>
    %154 = arith.addf %150, %153 : vector<8x10xf32>
    %cst_63 = arith.constant dense<0xFF800000> : vector<8xf32>
    %155 = vector.multi_reduction <maximumf>, %154, %cst_63 [1] : vector<8x10xf32> to vector<8xf32>
    %156 = vector.shape_cast %155 : vector<8xf32> to vector<8x1xf32>
    %157 = vector.broadcast %156 : vector<8x1xf32> to vector<8x10xf32>
    %158 = arith.subf %154, %157 : vector<8x10xf32>
    %159 = math.exp %158 : vector<8x10xf32>
    %cst_64 = arith.constant dense<0.000000e+00> : vector<8xf32>
    %160 = vector.multi_reduction <add>, %159, %cst_64 [1] : vector<8x10xf32> to vector<8xf32>
    %161 = vector.shape_cast %160 : vector<8xf32> to vector<8x1xf32>
    %162 = tpu.reciprocal %161 {approx = true} : vector<8x1xf32> -> vector<8x1xf32>
    %163 = vector.broadcast %162 : vector<8x1xf32> to vector<8x10xf32>
    %164 = arith.mulf %159, %163 : vector<8x10xf32>
    %c0_65 = arith.constant 0 : index
    %c40 = arith.constant 40 : index
    %165 = vector.load %arg14[%c0_65, %c40] : memref<8x50xf32, #tpu.memory_space<vmem>>, vector<8x10xf32>
    tpu.vector_store %arg14[%c0_65, %c40], %164 {strides = array<i32>} : memref<8x50xf32, #tpu.memory_space<vmem>>, vector<8x10xf32>,
    return
  }
}

</mosaic_0001>

<llo_original>
// kernel: tpu_custom_call.1
$region0: #{tpu_custom_call.1}
  #allocation0 [shape = 'u32[]', space=smem, size = 0x4, offset = 0x4, fixed_abs, tag = 'smem constant byte address 0x4 - core index']
  #allocation1 [shape = 'u32[144,128]{1,0:T(1,128)}', space=vmem, size = 0x12000, scoped, tag = 'internal scratch']
  %s0 = inlined_call_operand.vmem [shape: f32[8,160], index: 0, kind: input, shape index: {}]
  %s1 = inlined_call_operand.vmem [shape: f32[8,50], index: 1, kind: input, shape index: {}]
  %s2 = inlined_call_operand.vmem [shape: f32[8,160], index: 2, kind: input, shape index: {}]
  %s3 = inlined_call_operand.vmem [shape: f32[8,50], index: 3, kind: input, shape index: {}]
  %s4 = inlined_call_operand.vmem [shape: f32[160,180], index: 4, kind: input, shape index: {}]
  %s5 = inlined_call_operand.vmem [shape: f32[50,180], index: 5, kind: input, shape index: {}]
  %s6 = inlined_call_operand.vmem [shape: f32[1,180], index: 6, kind: input, shape index: {}]
  %s7 = inlined_call_operand.vmem [shape: f32[180,140], index: 7, kind: input, shape index: {}]
  %s8 = inlined_call_operand.vmem [shape: f32[1,140], index: 8, kind: input, shape index: {}]
  %s9 = inlined_call_operand.vmem [shape: f32[140,50], index: 9, kind: input, shape index: {}]
  %s10 = inlined_call_operand.vmem [shape: f32[1,50], index: 10, kind: input, shape index: {}]
  %s11 = inlined_call_operand.vmem [shape: f32[1,10], index: 11, kind: input, shape index: {}]
  %s12 = inlined_call_operand.vmem [shape: f32[1,10], index: 12, kind: input, shape index: {}]
  %s13 = inlined_call_operand.vmem [shape: f32[10,10], index: 13, kind: input, shape index: {}]
  %s14 = inlined_call_operand.hbm [shape: f32[8,50], index: 14, kind: output, shape index: {}]
  %s15 = sld [smem:[#allocation0]]
  $region66: #{tpu_custom_call.1} parent=0
    _
  %s17 = ssub.s32 1, %s15
  %s18 = scalar_select 0, %s17, %s15
  $region1: #{tpu_custom_call.1} parent=0
    #allocation2 [shape = 'u8[4096]{0}', space=vmem, size = 0x1000, scoped, tag = 'output window, operand 0, single buffered']
    #allocation3 [shape = 's32[1]{0}', space=sflag, size = 0x4, scoped, tag = 'scoped memory for tpu_custom_call.1']
    %19 = vsyncpa [#allocation3], 0
    // Predicated region
    $region2: #{tpu_custom_call.1} parent=1 // pred_check
      _
    $region3: #{tpu_custom_call.1} parent=1 // pred_check_branch
      %21 = sbr.rel (0) target = $region5
    $region4: #{tpu_custom_call.1} parent=1 // pred_region
      _
    $region5: #{tpu_custom_call.1} parent=1 // pred_fallthru
      _
    // Predicated region
    $region6: #{tpu_custom_call.1} parent=1 // pred_check
      _
    $region7: #{tpu_custom_call.1} parent=1 // pred_check_branch
      %23 = sbr.rel (0) target = $region9
    $region8: #{tpu_custom_call.1} parent=1 // pred_region
      _
    $region9: #{tpu_custom_call.1} parent=1 // pred_fallthru
      _
    // Predicated region
    $region10: #{tpu_custom_call.1} parent=1 // pred_check
      _
    $region11: #{tpu_custom_call.1} parent=1 // pred_check_branch
      %25 = sbr.rel (0) target = $region13
    $region12: #{tpu_custom_call.1} parent=1 // pred_region
      _
    $region13: #{tpu_custom_call.1} parent=1 // pred_fallthru
      _
    // Predicated region
    $region14: #{tpu_custom_call.1} parent=1 // pred_check
      _
    $region15: #{tpu_custom_call.1} parent=1 // pred_check_branch
      %27 = sbr.rel (0) target = $region17
    $region16: #{tpu_custom_call.1} parent=1 // pred_region
      _
    $region17: #{tpu_custom_call.1} parent=1 // pred_fallthru
      _
    // Predicated region
    $region18: #{tpu_custom_call.1} parent=1 // pred_check
      _
    $region19: #{tpu_custom_call.1} parent=1 // pred_check_branch
      %29 = sbr.rel (0) target = $region21
    $region20: #{tpu_custom_call.1} parent=1 // pred_region
      _
    $region21: #{tpu_custom_call.1} parent=1 // pred_fallthru
      _
    // Predicated region
    $region22: #{tpu_custom_call.1} parent=1 // pred_check
      _
    $region23: #{tpu_custom_call.1} parent=1 // pred_check_branch
      %31 = sbr.rel (0) target = $region25
    $region24: #{tpu_custom_call.1} parent=1 // pred_region
      _
    $region25: #{tpu_custom_call.1} parent=1 // pred_fallthru
      _
    // Predicated region
    $region26: #{tpu_custom_call.1} parent=1 // pred_check
      _
    $region27: #{tpu_custom_call.1} parent=1 // pred_check_branch
      %33 = sbr.rel (0) target = $region29
    $region28: #{tpu_custom_call.1} parent=1 // pred_region
      _
    $region29: #{tpu_custom_call.1} parent=1 // pred_fallthru
      _
    // Predicated region
    $region30: #{tpu_custom_call.1} parent=1 // pred_check
      _
    $region31: #{tpu_custom_call.1} parent=1 // pred_check_branch
      %35 = sbr.rel (0) target = $region33
    $region32: #{tpu_custom_call.1} parent=1 // pred_region
      _
    $region33: #{tpu_custom_call.1} parent=1 // pred_fallthru
      _
    // Predicated region
    $region34: #{tpu_custom_call.1} parent=1 // pred_check
      _
    $region35: #{tpu_custom_call.1} parent=1 // pred_check_branch
      %37 = sbr.rel (0) target = $region37
    $region36: #{tpu_custom_call.1} parent=1 // pred_region
      _
    $region37: #{tpu_custom_call.1} parent=1 // pred_fallthru
      _
    // Predicated region
    $region38: #{tpu_custom_call.1} parent=1 // pred_check
      _
    $region39: #{tpu_custom_call.1} parent=1 // pred_check_branch
      %39 = sbr.rel (0) target = $region41
    $region40: #{tpu_custom_call.1} parent=1 // pred_region
      _
    $region41: #{tpu_custom_call.1} parent=1 // pred_fallthru
      _
    // Predicated region
    $region42: #{tpu_custom_call.1} parent=1 // pred_check
      _
    $region43: #{tpu_custom_call.1} parent=1 // pred_check_branch
      %41 = sbr.rel (0) target = $region45
    $region44: #{tpu_custom_call.1} parent=1 // pred_region
      _
    $region45: #{tpu_custom_call.1} parent=1 // pred_fallthru
      _
    // Predicated region
    $region46: #{tpu_custom_call.1} parent=1 // pred_check
      _
    $region47: #{tpu_custom_call.1} parent=1 // pred_check_branch
      %43 = sbr.rel (0) target = $region49
    $region48: #{tpu_custom_call.1} parent=1 // pred_region
      _
    $region49: #{tpu_custom_call.1} parent=1 // pred_fallthru
      _
    // Predicated region
    $region50: #{tpu_custom_call.1} parent=1 // pred_check
      _
    $region51: #{tpu_custom_call.1} parent=1 // pred_check_branch
      %45 = sbr.rel (0) target = $region53
    $region52: #{tpu_custom_call.1} parent=1 // pred_region
      _
    $region53: #{tpu_custom_call.1} parent=1 // pred_fallthru
      _
    // Predicated region
    $region54: #{tpu_custom_call.1} parent=1 // pred_check
      _
    $region55: #{tpu_custom_call.1} parent=1 // pred_check_branch
      %47 = sbr.rel (0) target = $region57
    $region56: #{tpu_custom_call.1} parent=1 // pred_region
      _
    $region57: #{tpu_custom_call.1} parent=1 // pred_fallthru
      _
    %v48 = vld [vmem:[%s0] sm:$0xff]
    %v49 = vld [vmem:[%s0 + $0x8] sm:$0xff]
    %v50 = vld [vmem:[%s2] sm:$0xff]
    %v51 = vld [vmem:[%s2 + $0x8] sm:$0xff]
    %v52 = vadd.f32 %v48, %v50
    %v53 = vadd.f32 %v49, %v51
    %v54 = vld [vmem:[%s1] sm:$0xff]
    %v55 = vld [vmem:[%s3] sm:$0xff]
    %v56 = vadd.f32 %v54, %v55
    %v57 = vld [vmem:[%s4] sm:$0xff]
    %v58 = vld [vmem:[%s4 + $0x8] sm:$0xff]
    %v59 = vld [vmem:[%s4 + $0x10] sm:$0xff]
    %v60 = vld [vmem:[%s4 + $0x18] sm:$0xff]
    %v61 = vld [vmem:[%s4 + $0x20] sm:$0xff]
    %v62 = vld [vmem:[%s4 + $0x28] sm:$0xff]
    %v63 = vld [vmem:[%s4 + $0x30] sm:$0xff]
    %v64 = vld [vmem:[%s4 + $0x38] sm:$0xff]
    %v65 = vld [vmem:[%s4 + $0x40] sm:$0xff]
    %v66 = vld [vmem:[%s4 + $0x48] sm:$0xff]
    %v67 = vld [vmem:[%s4 + $0x50] sm:$0xff]
    %v68 = vld [vmem:[%s4 + $0x58] sm:$0xff]
    %v69 = vld [vmem:[%s4 + $0x60] sm:$0xff]
    %v70 = vld [vmem:[%s4 + $0x68] sm:$0xff]
    %v71 = vld [vmem:[%s4 + $0x70] sm:$0xff]
    %v72 = vld [vmem:[%s4 + $0x78] sm:$0xff]
    %v73 = vld [vmem:[%s4 + $0x80] sm:$0xff]
    %v74 = vld [vmem:[%s4 + $0x88] sm:$0xff]
    %v75 = vld [vmem:[%s4 + $0x90] sm:$0xff]
    %v76 = vld [vmem:[%s4 + $0x98] sm:$0xff]
    %v77 = vld [vmem:[%s4 + $0xa0] sm:$0xff]
    %v78 = vld [vmem:[%s4 + $0xa8] sm:$0xff]
    %v79 = vld [vmem:[%s4 + $0xb0] sm:$0xff]
    %v80 = vld [vmem:[%s4 + $0xb8] sm:$0xff]
    %v81 = vld [vmem:[%s4 + $0xc0] sm:$0xff]
    %v82 = vld [vmem:[%s4 + $0xc8] sm:$0xff]
    %v83 = vld [vmem:[%s4 + $0xd0] sm:$0xff]
    %v84 = vld [vmem:[%s4 + $0xd8] sm:$0xff]
    %v85 = vld [vmem:[%s4 + $0xe0] sm:$0xff]
    %v86 = vld [vmem:[%s4 + $0xe8] sm:$0xff]
    %v87 = vld [vmem:[%s4 + $0xf0] sm:$0xff]
    %v88 = vld [vmem:[%s4 + $0xf8] sm:$0xff]
    %v89 = vld [vmem:[%s4 + $0x100] sm:$0xff]
    %v90 = vld [vmem:[%s4 + $0x108] sm:$0xff]
    %v91 = vld [vmem:[%s4 + $0x110] sm:$0xff]
    %v92 = vld [vmem:[%s4 + $0x118] sm:$0xff]
    %v93 = vld [vmem:[%s4 + $0x120] sm:$0xff]
    %v94 = vld [vmem:[%s4 + $0x128] sm:$0xff]
    %v95 = vld [vmem:[%s4 + $0x130] sm:$0xff]
    %v96 = vld [vmem:[%s4 + $0x138] sm:$0xff]
    %v97 = vld [vmem:[%s5] sm:$0xff]
    %v98 = vld [vmem:[%s5 + $0x8] sm:$0xff]
    %v99 = vld [vmem:[%s5 + $0x10] sm:$0xff]
    %v100 = vld [vmem:[%s5 + $0x18] sm:$0xff]
    %v101 = vld [vmem:[%s5 + $0x20] sm:$0xff]
    %v102 = vld [vmem:[%s5 + $0x28] sm:$0xff]
    %v103 = vld [vmem:[%s5 + $0x30] sm:$0xff]
    %v104 = vld [vmem:[%s5 + $0x38] sm:$0xff]
    %v105 = vld [vmem:[%s5 + $0x40] sm:$0xff]
    %v106 = vld [vmem:[%s5 + $0x48] sm:$0xff]
    %v107 = vld [vmem:[%s5 + $0x50] sm:$0xff]
    %v108 = vld [vmem:[%s5 + $0x58] sm:$0xff]
    %v109 = vld [vmem:[%s5 + $0x60] sm:$0x3]
    %v110 = vld [vmem:[%s5 + $0x68] sm:$0x3]
    %vm111 = vcmask 408576
    %v113 = vsel %vm111, %v56, 0
    %vm115 = vcmask 1041408
    %v117 = vsel %vm115, %v109, 0
    %v120 = vsel %vm115, %v110, 0
    %122 = vmatprep.subr.mxu0 %v98
    %123 = vmatpush1.msra.mxu0 %v97
    %124 = vmatprep.subr.mxu0 %v100
    %125 = vmatpush1.msra.mxu0 %v99
    %126 = vmatprep.subr.mxu0 %v102
    %127 = vmatpush1.msra.mxu0 %v101
    %128 = vmatprep.subr.mxu0 %v104
    %129 = vmatpush1.msra.mxu0 %v103
    %130 = vmatprep.subr.mxu0 %v106
    %131 = vmatpush1.msra.mxu0 %v105
    %132 = vmatprep.subr.mxu0 %v108
    %133 = vmatpush1.msra.mxu0 %v107
    %134 = vmatprep.subr.mxu0 %v120
    %135 = vmatpush1.msra.mxu0 %v117
    %136 = vmatprep.subr.mxu0 0.0
    %137 = vmatpush1.msra.mxu0 0.0
    %138 = vmatprep.subr.mxu0 0.0
    %139 = vmatpush1.msra.mxu0 0.0
    %140 = vmatprep.subr.mxu0 0.0
    %141 = vmatpush1.msra.mxu0 0.0
    %142 = vmatprep.subr.mxu0 0.0
    %143 = vmatpush1.msra.mxu0 0.0
    %144 = vmatprep.subr.mxu0 0.0
    %145 = vmatpush1.msra.mxu0 0.0
    %146 = vmatprep.subr.mxu0 0.0
    %147 = vmatpush1.msra.mxu0 0.0
    %148 = vmatprep.subr.mxu0 0.0
    %149 = vmatpush1.msra.mxu0 0.0
    %150 = vmatprep.subr.mxu0 0.0
    %151 = vmatpush1.msra.mxu0 0.0
    %152 = vmatprep.subr.mxu0 0.0
    %153 = vmatpush1.msra.mxu0 0.0
    %154 = vmatprep.subr.mxu0 0.0
    %155 = vmatpush1.msra.mxu0 0.0
    %156 = vmatprep.subr.mxu0 0.0
    %157 = vmatpush1.msra.mxu0 0.0
    %158 = vmatprep.subr.mxu0 0.0
    %159 = vmatpush1.msra.mxu0 0.0
    %160 = vmatprep.subr.mxu0 0.0
    %161 = vmatpush1.msra.mxu0 0.0
    %162 = vmatprep.subr.mxu0 0.0
    %163 = vmatpush1.msra.mxu0 0.0
    %164 = vmatprep.subr.mxu0 0.0
    %165 = vmatpush1.msra.mxu0 0.0
    %166 = vmatprep.subr.mxu0 0.0
    %167 = vmatpush1.msra.mxu0 0.0
    %168 = vmatprep.subr.mxu0 0.0
    %169 = vmatpush1.msra.mxu0 0.0
    %170 = vmatprep.subr.mxu0 0.0
    %171 = vmatpush1.msra.mxu0 0.0
    %172 = vmatprep.subr.mxu0 0.0
    %173 = vmatpush1.msra.mxu0 0.0
    %174 = vmatprep.subr.mxu0 0.0
    %175 = vmatpush1.msra.mxu0 0.0
    %176 = vmatprep.subr.mxu0 0.0
    %177 = vmatpush1.msra.mxu0 0.0
    %178 = vmatprep.subr.mxu0 0.0
    %179 = vmatpush1.msra.mxu0 0.0
    %180 = vmatprep.subr.mxu0 0.0
    %181 = vmatpush1.msra.mxu0 0.0
    %182 = vmatprep.subr.mxu0 0.0
    %183 = vmatpush1.msra.mxu0 0.0
    %184 = vmatprep.subr.mxu0 0.0
    %185 = vmatpush1.msra.mxu0 0.0
    %186 = vmatprep.mubr.f32.mxu0 0.0
    %187 = vmatmul.mubr.f32.gmra.mrb[0].mxu0 %v113
    %v188 = vpop.f32.mrb[0].mxu0
    %v189 = vadd.f32 0.0, %v188
    %v190 = vpop.f32.mrb[0].mxu0
    %v191 = vadd.f32 0.0, %v190
    %192 = vdwg.mxu0
    %vm193 = vcmask 261120
    %v195 = vsel %vm193, %v53, 0
    %197 = vmatprep.subr.mxu0 %v58
    %198 = vmatpush1.msra.mxu0 %v57
    %199 = vmatprep.subr.mxu0 %v60
    %200 = vmatpush1.msra.mxu0 %v59
    %201 = vmatprep.subr.mxu0 %v62
    %202 = vmatpush1.msra.mxu0 %v61
    %203 = vmatprep.subr.mxu0 %v64
    %204 = vmatpush1.msra.mxu0 %v63
    %205 = vmatprep.subr.mxu0 %v66
    %206 = vmatpush1.msra.mxu0 %v65
    %207 = vmatprep.subr.mxu0 %v68
    %208 = vmatpush1.msra.mxu0 %v67
    %209 = vmatprep.subr.mxu0 %v70
    %210 = vmatpush1.msra.mxu0 %v69
    %211 = vmatprep.subr.mxu0 %v72
    %212 = vmatpush1.msra.mxu0 %v71
    %213 = vmatprep.subr.mxu0 %v74
    %214 = vmatpush1.msra.mxu0 %v73
    %215 = vmatprep.subr.mxu0 %v76
    %216 = vmatpush1.msra.mxu0 %v75
    %217 = vmatprep.subr.mxu0 %v78
    %218 = vmatpush1.msra.mxu0 %v77
    %219 = vmatprep.subr.mxu0 %v80
    %220 = vmatpush1.msra.mxu0 %v79
    %221 = vmatprep.subr.mxu0 %v82
    %222 = vmatpush1.msra.mxu0 %v81
    %223 = vmatprep.subr.mxu0 %v84
    %224 = vmatpush1.msra.mxu0 %v83
    %225 = vmatprep.subr.mxu0 %v86
    %226 = vmatpush1.msra.mxu0 %v85
    %227 = vmatprep.subr.mxu0 %v88
    %228 = vmatpush1.msra.mxu0 %v87
    %229 = vmatprep.subr.mxu0 %v90
    %230 = vmatpush1.msra.mxu0 %v89
    %231 = vmatprep.subr.mxu0 %v92
    %232 = vmatpush1.msra.mxu0 %v91
    %233 = vmatprep.subr.mxu0 %v94
    %234 = vmatpush1.msra.mxu0 %v93
    %235 = vmatprep.subr.mxu0 %v96
    %236 = vmatpush1.msra.mxu0 %v95
    %237 = vmatprep.subr.mxu0 0.0
    %238 = vmatpush1.msra.mxu0 0.0
    %239 = vmatprep.subr.mxu0 0.0
    %240 = vmatpush1.msra.mxu0 0.0
    %241 = vmatprep.subr.mxu0 0.0
    %242 = vmatpush1.msra.mxu0 0.0
    %243 = vmatprep.subr.mxu0 0.0
    %244 = vmatpush1.msra.mxu0 0.0
    %245 = vmatprep.subr.mxu0 0.0
    %246 = vmatpush1.msra.mxu0 0.0
    %247 = vmatprep.subr.mxu0 0.0
    %248 = vmatpush1.msra.mxu0 0.0
    %249 = vmatprep.subr.mxu0 0.0
    %250 = vmatpush1.msra.mxu0 0.0
    %251 = vmatprep.subr.mxu0 0.0
    %252 = vmatpush1.msra.mxu0 0.0
    %253 = vmatprep.subr.mxu0 0.0
    %254 = vmatpush1.msra.mxu0 0.0
    %255 = vmatprep.subr.mxu0 0.0
    %256 = vmatpush1.msra.mxu0 0.0
    %257 = vmatprep.subr.mxu0 0.0
    %258 = vmatpush1.msra.mxu0 0.0
    %259 = vmatprep.subr.mxu0 0.0
    %260 = vmatpush1.msra.mxu0 0.0
    %261 = vmatprep.mubr.f32.mxu0 %v195
    %262 = vmatmul.mubr.f32.gmra.mrb[0].mxu0 %v52
    %v263 = vpop.f32.mrb[0].mxu0
    %v264 = vadd.f32 %v189, %v263
    %v265 = vpop.f32.mrb[0].mxu0
    %v266 = vadd.f32 %v191, %v265
    %267 = vdwg.mxu0
    %v268 = vld [vmem:[%s6] sm:$0x3]
    %v270 = vlaneseq
    %v271 = vshrl.u32 %v270, 7
    %v272 = vsub.s32 0, %v271
    %v273 = vrot.slane %v268, %v272
    %v274 = vlaneseq
    %v275 = vshrl.u32 %v274, 7
    %v276 = vsub.s32 1, %v275
    %v277 = vrot.slane %v268, %v276
    %v280 = vadd.f32 %v264, %v273
    %v281 = vadd.f32 %v266, %v277
    %v282 = vmax.f32 %v280, 0.0
    %v283 = vmax.f32 %v281, 0.0
    %v284 = vld [vmem:[%s7] sm:$0xff]
    %v285 = vld [vmem:[%s7 + $0x8] sm:$0xff]
    %v286 = vld [vmem:[%s7 + $0x10] sm:$0xff]
    %v287 = vld [vmem:[%s7 + $0x18] sm:$0xff]
    %v288 = vld [vmem:[%s7 + $0x20] sm:$0xff]
    %v289 = vld [vmem:[%s7 + $0x28] sm:$0xff]
    %v290 = vld [vmem:[%s7 + $0x30] sm:$0xff]
    %v291 = vld [vmem:[%s7 + $0x38] sm:$0xff]
    %v292 = vld [vmem:[%s7 + $0x40] sm:$0xff]
    %v293 = vld [vmem:[%s7 + $0x48] sm:$0xff]
    %v294 = vld [vmem:[%s7 + $0x50] sm:$0xff]
    %v295 = vld [vmem:[%s7 + $0x58] sm:$0xff]
    %v296 = vld [vmem:[%s7 + $0x60] sm:$0xff]
    %v297 = vld [vmem:[%s7 + $0x68] sm:$0xff]
    %v298 = vld [vmem:[%s7 + $0x70] sm:$0xff]
    %v299 = vld [vmem:[%s7 + $0x78] sm:$0xff]
    %v300 = vld [vmem:[%s7 + $0x80] sm:$0xff]
    %v301 = vld [vmem:[%s7 + $0x88] sm:$0xff]
    %v302 = vld [vmem:[%s7 + $0x90] sm:$0xff]
    %v303 = vld [vmem:[%s7 + $0x98] sm:$0xff]
    %v304 = vld [vmem:[%s7 + $0xa0] sm:$0xff]
    %v305 = vld [vmem:[%s7 + $0xa8] sm:$0xff]
    %v306 = vld [vmem:[%s7 + $0xb0] sm:$0xff]
    %v307 = vld [vmem:[%s7 + $0xb8] sm:$0xff]
    %v308 = vld [vmem:[%s7 + $0xc0] sm:$0xff]
    %v309 = vld [vmem:[%s7 + $0xc8] sm:$0xff]
    %v310 = vld [vmem:[%s7 + $0xd0] sm:$0xff]
    %v311 = vld [vmem:[%s7 + $0xd8] sm:$0xff]
    %v312 = vld [vmem:[%s7 + $0xe0] sm:$0xff]
    %v313 = vld [vmem:[%s7 + $0xe8] sm:$0xff]
    %v314 = vld [vmem:[%s7 + $0xf0] sm:$0xff]
    %v315 = vld [vmem:[%s7 + $0xf8] sm:$0xff]
    %v316 = vld [vmem:[%s7 + $0x100] sm:$0xff]
    %v317 = vld [vmem:[%s7 + $0x108] sm:$0xff]
    %v318 = vld [vmem:[%s7 + $0x110] sm:$0xff]
    %v319 = vld [vmem:[%s7 + $0x118] sm:$0xff]
    %v320 = vld [vmem:[%s7 + $0x120] sm:$0xff]
    %v321 = vld [vmem:[%s7 + $0x128] sm:$0xff]
    %v322 = vld [vmem:[%s7 + $0x130] sm:$0xff]
    %v323 = vld [vmem:[%s7 + $0x138] sm:$0xff]
    %v324 = vld [vmem:[%s7 + $0x140] sm:$0xff]
    %v325 = vld [vmem:[%s7 + $0x148] sm:$0xff]
    %v326 = vld [vmem:[%s7 + $0x150] sm:$0xff]
    %v327 = vld [vmem:[%s7 + $0x158] sm:$0xff]
    %v328 = vld [vmem:[%s7 + $0x160] sm:$0xf]
    %v329 = vld [vmem:[%s7 + $0x168] sm:$0xf]
    %v330 = vld [vmem:[%s8] sm:$0x3]
    %v332 = vlaneseq
    %v333 = vshrl.u32 %v332, 7
    %v334 = vsub.s32 0, %v333
    %v335 = vrot.slane %v330, %v334
    %v336 = vlaneseq
    %v337 = vshrl.u32 %v336, 7
    %v338 = vsub.s32 1, %v337
    %v339 = vrot.slane %v330, %v338
    %vm342 = vcmask 424960
    %v344 = vsel %vm342, %v283, 0
    %vm346 = vcmask 1043456
    %v348 = vsel %vm346, %v328, 0
    %v351 = vsel %vm346, %v329, 0
    %353 = vmatprep.subr.mxu0 %v285
    %354 = vmatpush1.msra.mxu0 %v284
    %355 = vmatprep.subr.mxu0 %v287
    %356 = vmatpush1.msra.mxu0 %v286
    %357 = vmatprep.subr.mxu0 %v289
    %358 = vmatpush1.msra.mxu0 %v288
    %359 = vmatprep.subr.mxu0 %v291
    %360 = vmatpush1.msra.mxu0 %v290
    %361 = vmatprep.subr.mxu0 %v293
    %362 = vmatpush1.msra.mxu0 %v292
    %363 = vmatprep.subr.mxu0 %v295
    %364 = vmatpush1.msra.mxu0 %v294
    %365 = vmatprep.subr.mxu0 %v297
    %366 = vmatpush1.msra.mxu0 %v296
    %367 = vmatprep.subr.mxu0 %v299
    %368 = vmatpush1.msra.mxu0 %v298
    %369 = vmatprep.subr.mxu0 %v301
    %370 = vmatpush1.msra.mxu0 %v300
    %371 = vmatprep.subr.mxu0 %v303
    %372 = vmatpush1.msra.mxu0 %v302
    %373 = vmatprep.subr.mxu0 %v305
    %374 = vmatpush1.msra.mxu0 %v304
    %375 = vmatprep.subr.mxu0 %v307
    %376 = vmatpush1.msra.mxu0 %v306
    %377 = vmatprep.subr.mxu0 %v309
    %378 = vmatpush1.msra.mxu0 %v308
    %379 = vmatprep.subr.mxu0 %v311
    %380 = vmatpush1.msra.mxu0 %v310
    %381 = vmatprep.subr.mxu0 %v313
    %382 = vmatpush1.msra.mxu0 %v312
    %383 = vmatprep.subr.mxu0 %v315
    %384 = vmatpush1.msra.mxu0 %v314
    %385 = vmatprep.subr.mxu0 %v317
    %386 = vmatpush1.msra.mxu0 %v316
    %387 = vmatprep.subr.mxu0 %v319
    %388 = vmatpush1.msra.mxu0 %v318
    %389 = vmatprep.subr.mxu0 %v321
    %390 = vmatpush1.msra.mxu0 %v320
    %391 = vmatprep.subr.mxu0 %v323
    %392 = vmatpush1.msra.mxu0 %v322
    %393 = vmatprep.subr.mxu0 %v325
    %394 = vmatpush1.msra.mxu0 %v324
    %395 = vmatprep.subr.mxu0 %v327
    %396 = vmatpush1.msra.mxu0 %v326
    %397 = vmatprep.subr.mxu0 %v351
    %398 = vmatpush1.msra.mxu0 %v348
    %399 = vmatprep.subr.mxu0 0.0
    %400 = vmatpush1.msra.mxu0 0.0
    %401 = vmatprep.subr.mxu0 0.0
    %402 = vmatpush1.msra.mxu0 0.0
    %403 = vmatprep.subr.mxu0 0.0
    %404 = vmatpush1.msra.mxu0 0.0
    %405 = vmatprep.subr.mxu0 0.0
    %406 = vmatpush1.msra.mxu0 0.0
    %407 = vmatprep.subr.mxu0 0.0
    %408 = vmatpush1.msra.mxu0 0.0
    %409 = vmatprep.subr.mxu0 0.0
    %410 = vmatpush1.msra.mxu0 0.0
    %411 = vmatprep.subr.mxu0 0.0
    %412 = vmatpush1.msra.mxu0 0.0
    %413 = vmatprep.subr.mxu0 0.0
    %414 = vmatpush1.msra.mxu0 0.0
    %415 = vmatprep.subr.mxu0 0.0
    %416 = vmatpush1.msra.mxu0 0.0
    %417 = vmatprep.mubr.f32.mxu0 %v344
    %418 = vmatmul.mubr.f32.gmra.mrb[0].mxu0 %v282
    %v419 = vpop.f32.mrb[0].mxu0
    %v420 = vadd.f32 %v335, %v419
    %v421 = vpop.f32.mrb[0].mxu0
    %v422 = vadd.f32 %v339, %v421
    %423 = vdwg.mxu0
    %v424 = vmax.f32 %v420, 0.0
    %v425 = vmax.f32 %v422, 0.0
    %v426 = vld [vmem:[%s9] sm:$0xff]
    %v427 = vld [vmem:[%s9 + $0x8] sm:$0xff]
    %v428 = vld [vmem:[%s9 + $0x10] sm:$0xff]
    %v429 = vld [vmem:[%s9 + $0x18] sm:$0xff]
    %v430 = vld [vmem:[%s9 + $0x20] sm:$0xff]
    %v431 = vld [vmem:[%s9 + $0x28] sm:$0xff]
    %v432 = vld [vmem:[%s9 + $0x30] sm:$0xff]
    %v433 = vld [vmem:[%s9 + $0x38] sm:$0xff]
    %v434 = vld [vmem:[%s9 + $0x40] sm:$0xff]
    %v435 = vld [vmem:[%s9 + $0x48] sm:$0xff]
    %v436 = vld [vmem:[%s9 + $0x50] sm:$0xff]
    %v437 = vld [vmem:[%s9 + $0x58] sm:$0xff]
    %v438 = vld [vmem:[%s9 + $0x60] sm:$0xff]
    %v439 = vld [vmem:[%s9 + $0x68] sm:$0xff]
    %v440 = vld [vmem:[%s9 + $0x70] sm:$0xff]
    %v441 = vld [vmem:[%s9 + $0x78] sm:$0xff]
    %v442 = vld [vmem:[%s9 + $0x80] sm:$0xff]
    %v443 = vld [vmem:[%s9 + $0x88] sm:$0xf]
    %v444 = vld [vmem:[%s10] sm:$0x1]
    %v446 = vlaneseq
    %v447 = vshrl.u32 %v446, 7
    %v448 = vsub.s32 0, %v447
    %v449 = vrot.slane %v444, %v448
    %vm451 = vcmask 97280
    %v453 = vsel %vm451, %v425, 0
    %v456 = vsel %vm346, %v443, 0
    %458 = vmatprep.subr.mxu0 0.0
    %459 = vmatpush1.msra.mxu0 %v426
    %460 = vmatprep.subr.mxu0 0.0
    %461 = vmatpush1.msra.mxu0 %v427
    %462 = vmatprep.subr.mxu0 0.0
    %463 = vmatpush1.msra.mxu0 %v428
    %464 = vmatprep.subr.mxu0 0.0
    %465 = vmatpush1.msra.mxu0 %v429
    %466 = vmatprep.subr.mxu0 0.0
    %467 = vmatpush1.msra.mxu0 %v430
    %468 = vmatprep.subr.mxu0 0.0
    %469 = vmatpush1.msra.mxu0 %v431
    %470 = vmatprep.subr.mxu0 0.0
    %471 = vmatpush1.msra.mxu0 %v432
    %472 = vmatprep.subr.mxu0 0.0
    %473 = vmatpush1.msra.mxu0 %v433
    %474 = vmatprep.subr.mxu0 0.0
    %475 = vmatpush1.msra.mxu0 %v434
    %476 = vmatprep.subr.mxu0 0.0
    %477 = vmatpush1.msra.mxu0 %v435
    %478 = vmatprep.subr.mxu0 0.0
    %479 = vmatpush1.msra.mxu0 %v436
    %480 = vmatprep.subr.mxu0 0.0
    %481 = vmatpush1.msra.mxu0 %v437
    %482 = vmatprep.subr.mxu0 0.0
    %483 = vmatpush1.msra.mxu0 %v438
    %484 = vmatprep.subr.mxu0 0.0
    %485 = vmatpush1.msra.mxu0 %v439
    %486 = vmatprep.subr.mxu0 0.0
    %487 = vmatpush1.msra.mxu0 %v440
    %488 = vmatprep.subr.mxu0 0.0
    %489 = vmatpush1.msra.mxu0 %v441
    %490 = vmatprep.subr.mxu0 0.0
    %491 = vmatpush1.msra.mxu0 %v442
    %492 = vmatprep.subr.mxu0 0.0
    %493 = vmatpush1.msra.mxu0 %v456
    %494 = vmatprep.subr.mxu0 0.0
    %495 = vmatpush1.msra.mxu0 0.0
    %496 = vmatprep.subr.mxu0 0.0
    %497 = vmatpush1.msra.mxu0 0.0
    %498 = vmatprep.subr.mxu0 0.0
    %499 = vmatpush1.msra.mxu0 0.0
    %500 = vmatprep.subr.mxu0 0.0
    %501 = vmatpush1.msra.mxu0 0.0
    %502 = vmatprep.subr.mxu0 0.0
    %503 = vmatpush1.msra.mxu0 0.0
    %504 = vmatprep.subr.mxu0 0.0
    %505 = vmatpush1.msra.mxu0 0.0
    %506 = vmatprep.subr.mxu0 0.0
    %507 = vmatpush1.msra.mxu0 0.0
    %508 = vmatprep.subr.mxu0 0.0
    %509 = vmatpush1.msra.mxu0 0.0
    %510 = vmatprep.subr.mxu0 0.0
    %511 = vmatpush1.msra.mxu0 0.0
    %512 = vmatprep.subr.mxu0 0.0
    %513 = vmatpush1.msra.mxu0 0.0
    %514 = vmatprep.subr.mxu0 0.0
    %515 = vmatpush1.msra.mxu0 0.0
    %516 = vmatprep.subr.mxu0 0.0
    %517 = vmatpush1.msra.mxu0 0.0
    %518 = vmatprep.subr.mxu0 0.0
    %519 = vmatpush1.msra.mxu0 0.0
    %520 = vmatprep.subr.mxu0 0.0
    %521 = vmatpush1.msra.mxu0 0.0
    %522 = vmatprep.mubr.f32.mxu0 %v453
    %523 = vmatmul.mubr.f32.gmra.mrb[0].mxu0 %v424
    %v524 = vpop.f32.mrb[0].mxu0
    %v525 = vadd.f32 %v449, %v524
    %v526 = vpop.f32.mrb[0].mxu0
    %527 = vdwg.mxu0
    %529 = vrot.lane.b32.xlu0 %v525, 118
    %v530 = vpop.permute.xlu0 %529
    %v532 = vadd.f32 %v525, %v530
    %533 = vrot.lane.b32.xlu0 %v525, 108
    %v534 = vpop.permute.xlu0 %533
    %v536 = vadd.f32 %v532, %v534
    %537 = vrot.lane.b32.xlu0 %v525, 98
    %v538 = vpop.permute.xlu0 %537
    %v540 = vadd.f32 %v536, %v538
    %541 = vrot.lane.b32.xlu0 %v525, 88
    %v542 = vpop.permute.xlu0 %541
    %v544 = vadd.f32 %v540, %v542
    %v545 = vmul.f32 %v544, 0.2
    %v546 = vsub.f32 %v525, %v545
    %v547 = vmul.f32 %v546, %v546
    %549 = vrot.lane.b32.xlu0 %v545, 10
    %v550 = vpop.permute.xlu0 %549
    %v552 = vsub.f32 %v525, %v550
    %v553 = vmul.f32 %v552, %v552
    %555 = vrot.lane.b32.xlu0 %v553, 118
    %v556 = vpop.permute.xlu0 %555
    %v558 = vadd.f32 %v547, %v556
    %559 = vrot.lane.b32.xlu0 %v545, 20
    %v560 = vpop.permute.xlu0 %559
    %v562 = vsub.f32 %v525, %v560
    %v563 = vmul.f32 %v562, %v562
    %565 = vrot.lane.b32.xlu0 %v563, 108
    %v566 = vpop.permute.xlu0 %565
    %v568 = vadd.f32 %v558, %v566
    %569 = vrot.lane.b32.xlu0 %v545, 30
    %v570 = vpop.permute.xlu0 %569
    %v572 = vsub.f32 %v525, %v570
    %v573 = vmul.f32 %v572, %v572
    %575 = vrot.lane.b32.xlu0 %v573, 98
    %v576 = vpop.permute.xlu0 %575
    %v578 = vadd.f32 %v568, %v576
    %579 = vrot.lane.b32.xlu0 %v545, 40
    %v580 = vpop.permute.xlu0 %579
    %v582 = vsub.f32 %v525, %v580
    %v583 = vmul.f32 %v582, %v582
    %585 = vrot.lane.b32.xlu0 %v583, 88
    %v586 = vpop.permute.xlu0 %585
    %v588 = vadd.f32 %v578, %v586
    %v589 = vmul.f32 %v588, 0.2
    %v590 = vadd.f32 %v589, 1e-05
    %v591 = vrsqrt.pop %v590
    %v592 = vld [vmem:[%s11] sm:$0x1]
    %v593 = vld [vmem:[%s12] sm:$0x1]
    %v595 = vlaneseq
    %v596 = vshrl.u32 %v595, 7
    %v597 = vsub.s32 0, %v596
    %v598 = vrot.slane %v592, %v597
    %v600 = vmul.f32 %v598, %v546
    %v601 = vmul.f32 %v600, %v591
    %v603 = vlaneseq
    %v604 = vshrl.u32 %v603, 7
    %v605 = vsub.s32 0, %v604
    %v606 = vrot.slane %v593, %v605
    %v608 = vadd.f32 %v601, %v606
    %v609 = vld [vmem:[%s13] sm:$0xff]
    %v610 = vld [vmem:[%s13 + $0x8] sm:$0x3]
    %vm611 = vcmask 80896
    %v613 = vsel %vm611, %v54, 0
    %v616 = vsel %vm115, %v610, 0
    %618 = vmatprep.subr.mxu0 0.0
    %619 = vmatpush1.msra.mxu0 %v609
    %620 = vmatprep.subr.mxu0 0.0
    %621 = vmatpush1.msra.mxu0 %v616
    %622 = vmatprep.subr.mxu0 0.0
    %623 = vmatpush1.msra.mxu0 0.0
    %624 = vmatprep.subr.mxu0 0.0
    %625 = vmatpush1.msra.mxu0 0.0
    %626 = vmatprep.subr.mxu0 0.0
    %627 = vmatpush1.msra.mxu0 0.0
    %628 = vmatprep.subr.mxu0 0.0
    %629 = vmatpush1.msra.mxu0 0.0
    %630 = vmatprep.subr.mxu0 0.0
    %631 = vmatpush1.msra.mxu0 0.0
    %632 = vmatprep.subr.mxu0 0.0
    %633 = vmatpush1.msra.mxu0 0.0
    %634 = vmatprep.subr.mxu0 0.0
    %635 = vmatpush1.msra.mxu0 0.0
    %636 = vmatprep.subr.mxu0 0.0
    %637 = vmatpush1.msra.mxu0 0.0
    %638 = vmatprep.subr.mxu0 0.0
    %639 = vmatpush1.msra.mxu0 0.0
    %640 = vmatprep.subr.mxu0 0.0
    %641 = vmatpush1.msra.mxu0 0.0
    %642 = vmatprep.subr.mxu0 0.0
    %643 = vmatpush1.msra.mxu0 0.0
    %644 = vmatprep.subr.mxu0 0.0
    %645 = vmatpush1.msra.mxu0 0.0
    %646 = vmatprep.subr.mxu0 0.0
    %647 = vmatpush1.msra.mxu0 0.0
    %648 = vmatprep.subr.mxu0 0.0
    %649 = vmatpush1.msra.mxu0 0.0
    %650 = vmatprep.subr.mxu0 0.0
    %651 = vmatpush1.msra.mxu0 0.0
    %652 = vmatprep.subr.mxu0 0.0
    %653 = vmatpush1.msra.mxu0 0.0
    %654 = vmatprep.subr.mxu0 0.0
    %655 = vmatpush1.msra.mxu0 0.0
    %656 = vmatprep.subr.mxu0 0.0
    %657 = vmatpush1.msra.mxu0 0.0
    %658 = vmatprep.subr.mxu0 0.0
    %659 = vmatpush1.msra.mxu0 0.0
    %660 = vmatprep.subr.mxu0 0.0
    %661 = vmatpush1.msra.mxu0 0.0
    %662 = vmatprep.subr.mxu0 0.0
    %663 = vmatpush1.msra.mxu0 0.0
    %664 = vmatprep.subr.mxu0 0.0
    %665 = vmatpush1.msra.mxu0 0.0
    %666 = vmatprep.subr.mxu0 0.0
    %667 = vmatpush1.msra.mxu0 0.0
    %668 = vmatprep.subr.mxu0 0.0
    %669 = vmatpush1.msra.mxu0 0.0
    %670 = vmatprep.subr.mxu0 0.0
    %671 = vmatpush1.msra.mxu0 0.0
    %672 = vmatprep.subr.mxu0 0.0
    %673 = vmatpush1.msra.mxu0 0.0
    %674 = vmatprep.subr.mxu0 0.0
    %675 = vmatpush1.msra.mxu0 0.0
    %676 = vmatprep.subr.mxu0 0.0
    %677 = vmatpush1.msra.mxu0 0.0
    %678 = vmatprep.subr.mxu0 0.0
    %679 = vmatpush1.msra.mxu0 0.0
    %680 = vmatprep.subr.mxu0 0.0
    %681 = vmatpush1.msra.mxu0 0.0
    %682 = vmatprep.mubr.f32.mxu0 0.0
    %683 = vmatmul.mubr.f32.gmra.mrb[0].mxu0 %v613
    %v684 = vpop.f32.mrb[0].mxu0
    %v685 = vadd.f32 0.0, %v684
    %v686 = vpop.f32.mrb[0].mxu0
    %687 = vdwg.mxu0
    %v688 = vadd.f32 %v608, %v685
    %v689 = vsel %vm611, %v688, -inf
    %690 = vmax.xlane.f32.xlu0 %v689
    %v691 = vpop.xlane.xlu0 %690
    %v692 = vsub.f32 %v688, %v691
    %v693 = vmul.f32 %v692, 1.442695
    %v694 = vpow.pop %v693
    %v695 = vsel %vm611, %v694, 0.0
    %696 = vadd.xlane.f32.xlu0 %v695
    %v697 = vpop.xlane.xlu0 %696
    %v698 = vrcp.pop %v697
    %v699 = vmul.f32 %v694, %v698
    %700 = vst.msk [vmem:[#allocation2] sm:$0xff] %vm611, %v699
    %702 = vrot.lane.b32.xlu0 %v552, 118
    %v703 = vpop.permute.xlu0 %702
    %v705 = vmul.f32 %v598, %v703
    %v706 = vmul.f32 %v705, %v591
    %v707 = vadd.f32 %v706, %v606
    %v708 = vld [vmem:[%s13] sm:$0xff]
    %v709 = vld [vmem:[%s13 + $0x8] sm:$0x3]
    %710 = vrot.lane.b32.xlu0 %v54, 118
    %v711 = vpop.permute.xlu0 %710
    %v712 = vsel %vm611, %v711, 0
    %v715 = vsel %vm115, %v709, 0
    %717 = vmatprep.subr.mxu0 0.0
    %718 = vmatpush1.msra.mxu0 %v708
    %719 = vmatprep.subr.mxu0 0.0
    %720 = vmatpush1.msra.mxu0 %v715
    %721 = vmatprep.subr.mxu0 0.0
    %722 = vmatpush1.msra.mxu0 0.0
    %723 = vmatprep.subr.mxu0 0.0
    %724 = vmatpush1.msra.mxu0 0.0
    %725 = vmatprep.subr.mxu0 0.0
    %726 = vmatpush1.msra.mxu0 0.0
    %727 = vmatprep.subr.mxu0 0.0
    %728 = vmatpush1.msra.mxu0 0.0
    %729 = vmatprep.subr.mxu0 0.0
    %730 = vmatpush1.msra.mxu0 0.0
    %731 = vmatprep.subr.mxu0 0.0
    %732 = vmatpush1.msra.mxu0 0.0
    %733 = vmatprep.subr.mxu0 0.0
    %734 = vmatpush1.msra.mxu0 0.0
    %735 = vmatprep.subr.mxu0 0.0
    %736 = vmatpush1.msra.mxu0 0.0
    %737 = vmatprep.subr.mxu0 0.0
    %738 = vmatpush1.msra.mxu0 0.0
    %739 = vmatprep.subr.mxu0 0.0
    %740 = vmatpush1.msra.mxu0 0.0
    %741 = vmatprep.subr.mxu0 0.0
    %742 = vmatpush1.msra.mxu0 0.0
    %743 = vmatprep.subr.mxu0 0.0
    %744 = vmatpush1.msra.mxu0 0.0
    %745 = vmatprep.subr.mxu0 0.0
    %746 = vmatpush1.msra.mxu0 0.0
    %747 = vmatprep.subr.mxu0 0.0
    %748 = vmatpush1.msra.mxu0 0.0
    %749 = vmatprep.subr.mxu0 0.0
    %750 = vmatpush1.msra.mxu0 0.0
    %751 = vmatprep.subr.mxu0 0.0
    %752 = vmatpush1.msra.mxu0 0.0
    %753 = vmatprep.subr.mxu0 0.0
    %754 = vmatpush1.msra.mxu0 0.0
    %755 = vmatprep.subr.mxu0 0.0
    %756 = vmatpush1.msra.mxu0 0.0
    %757 = vmatprep.subr.mxu0 0.0
    %758 = vmatpush1.msra.mxu0 0.0
    %759 = vmatprep.subr.mxu0 0.0
    %760 = vmatpush1.msra.mxu0 0.0
    %761 = vmatprep.subr.mxu0 0.0
    %762 = vmatpush1.msra.mxu0 0.0
    %763 = vmatprep.subr.mxu0 0.0
    %764 = vmatpush1.msra.mxu0 0.0
    %765 = vmatprep.subr.mxu0 0.0
    %766 = vmatpush1.msra.mxu0 0.0
    %767 = vmatprep.subr.mxu0 0.0
    %768 = vmatpush1.msra.mxu0 0.0
    %769 = vmatprep.subr.mxu0 0.0
    %770 = vmatpush1.msra.mxu0 0.0
    %771 = vmatprep.subr.mxu0 0.0
    %772 = vmatpush1.msra.mxu0 0.0
    %773 = vmatprep.subr.mxu0 0.0
    %774 = vmatpush1.msra.mxu0 0.0
    %775 = vmatprep.subr.mxu0 0.0
    %776 = vmatpush1.msra.mxu0 0.0
    %777 = vmatprep.subr.mxu0 0.0
    %778 = vmatpush1.msra.mxu0 0.0
    %779 = vmatprep.subr.mxu0 0.0
    %780 = vmatpush1.msra.mxu0 0.0
    %781 = vmatprep.mubr.f32.mxu0 0.0
    %782 = vmatmul.mubr.f32.gmra.mrb[0].mxu0 %v712
    %v783 = vpop.f32.mrb[0].mxu0
    %v784 = vadd.f32 0.0, %v783
    %v785 = vpop.f32.mrb[0].mxu0
    %786 = vdwg.mxu0
    %v787 = vadd.f32 %v707, %v784
    %v788 = vsel %vm611, %v787, -inf
    %789 = vmax.xlane.f32.xlu0 %v788
    %v790 = vpop.xlane.xlu0 %789
    %v791 = vsub.f32 %v787, %v790
    %v792 = vmul.f32 %v791, 1.442695
    %v793 = vpow.pop %v792
    %v794 = vsel %vm611, %v793, 0.0
    %795 = vadd.xlane.f32.xlu0 %v794
    %v796 = vpop.xlane.xlu0 %795
    %v797 = vrcp.pop %v796
    %v798 = vmul.f32 %v793, %v797
    %800 = vrot.lane.b32.xlu0 %v798, 10
    %v801 = vpop.permute.xlu0 %800
    %vm803 = vcmask 162896
    %804 = vst.msk [vmem:[#allocation2] sm:$0xff] %vm803, %v801
    %806 = vrot.lane.b32.xlu0 %v562, 108
    %v807 = vpop.permute.xlu0 %806
    %v809 = vmul.f32 %v598, %v807
    %v810 = vmul.f32 %v809, %v591
    %v811 = vadd.f32 %v810, %v606
    %v812 = vld [vmem:[%s13] sm:$0xff]
    %v813 = vld [vmem:[%s13 + $0x8] sm:$0x3]
    %814 = vrot.lane.b32.xlu0 %v54, 108
    %v815 = vpop.permute.xlu0 %814
    %v816 = vsel %vm611, %v815, 0
    %v819 = vsel %vm115, %v813, 0
    %821 = vmatprep.subr.mxu0 0.0
    %822 = vmatpush1.msra.mxu0 %v812
    %823 = vmatprep.subr.mxu0 0.0
    %824 = vmatpush1.msra.mxu0 %v819
    %825 = vmatprep.subr.mxu0 0.0
    %826 = vmatpush1.msra.mxu0 0.0
    %827 = vmatprep.subr.mxu0 0.0
    %828 = vmatpush1.msra.mxu0 0.0
    %829 = vmatprep.subr.mxu0 0.0
    %830 = vmatpush1.msra.mxu0 0.0
    %831 = vmatprep.subr.mxu0 0.0
    %832 = vmatpush1.msra.mxu0 0.0
    %833 = vmatprep.subr.mxu0 0.0
    %834 = vmatpush1.msra.mxu0 0.0
    %835 = vmatprep.subr.mxu0 0.0
    %836 = vmatpush1.msra.mxu0 0.0
    %837 = vmatprep.subr.mxu0 0.0
    %838 = vmatpush1.msra.mxu0 0.0
    %839 = vmatprep.subr.mxu0 0.0
    %840 = vmatpush1.msra.mxu0 0.0
    %841 = vmatprep.subr.mxu0 0.0
    %842 = vmatpush1.msra.mxu0 0.0
    %843 = vmatprep.subr.mxu0 0.0
    %844 = vmatpush1.msra.mxu0 0.0
    %845 = vmatprep.subr.mxu0 0.0
    %846 = vmatpush1.msra.mxu0 0.0
    %847 = vmatprep.subr.mxu0 0.0
    %848 = vmatpush1.msra.mxu0 0.0
    %849 = vmatprep.subr.mxu0 0.0
    %850 = vmatpush1.msra.mxu0 0.0
    %851 = vmatprep.subr.mxu0 0.0
    %852 = vmatpush1.msra.mxu0 0.0
    %853 = vmatprep.subr.mxu0 0.0
    %854 = vmatpush1.msra.mxu0 0.0
    %855 = vmatprep.subr.mxu0 0.0
    %856 = vmatpush1.msra.mxu0 0.0
    %857 = vmatprep.subr.mxu0 0.0
    %858 = vmatpush1.msra.mxu0 0.0
    %859 = vmatprep.subr.mxu0 0.0
    %860 = vmatpush1.msra.mxu0 0.0
    %861 = vmatprep.subr.mxu0 0.0
    %862 = vmatpush1.msra.mxu0 0.0
    %863 = vmatprep.subr.mxu0 0.0
    %864 = vmatpush1.msra.mxu0 0.0
    %865 = vmatprep.subr.mxu0 0.0
    %866 = vmatpush1.msra.mxu0 0.0
    %867 = vmatprep.subr.mxu0 0.0
    %868 = vmatpush1.msra.mxu0 0.0
    %869 = vmatprep.subr.mxu0 0.0
    %870 = vmatpush1.msra.mxu0 0.0
    %871 = vmatprep.subr.mxu0 0.0
    %872 = vmatpush1.msra.mxu0 0.0
    %873 = vmatprep.subr.mxu0 0.0
    %874 = vmatpush1.msra.mxu0 0.0
    %875 = vmatprep.subr.mxu0 0.0
    %876 = vmatpush1.msra.mxu0 0.0
    %877 = vmatprep.subr.mxu0 0.0
    %878 = vmatpush1.msra.mxu0 0.0
    %879 = vmatprep.subr.mxu0 0.0
    %880 = vmatpush1.msra.mxu0 0.0
    %881 = vmatprep.subr.mxu0 0.0
    %882 = vmatpush1.msra.mxu0 0.0
    %883 = vmatprep.subr.mxu0 0.0
    %884 = vmatpush1.msra.mxu0 0.0
    %885 = vmatprep.mubr.f32.mxu0 0.0
    %886 = vmatmul.mubr.f32.gmra.mrb[0].mxu0 %v816
    %v887 = vpop.f32.mrb[0].mxu0
    %v888 = vadd.f32 0.0, %v887
    %v889 = vpop.f32.mrb[0].mxu0
    %890 = vdwg.mxu0
    %v891 = vadd.f32 %v811, %v888
    %v892 = vsel %vm611, %v891, -inf
    %893 = vmax.xlane.f32.xlu0 %v892
    %v894 = vpop.xlane.xlu0 %893
    %v895 = vsub.f32 %v891, %v894
    %v896 = vmul.f32 %v895, 1.442695
    %v897 = vpow.pop %v896
    %v898 = vsel %vm611, %v897, 0.0
    %899 = vadd.xlane.f32.xlu0 %v898
    %v900 = vpop.xlane.xlu0 %899
    %v901 = vrcp.pop %v900
    %v902 = vmul.f32 %v897, %v901
    %904 = vrot.lane.b32.xlu0 %v902, 20
    %v905 = vpop.permute.xlu0 %904
    %vm907 = vcmask 244896
    %908 = vst.msk [vmem:[#allocation2] sm:$0xff] %vm907, %v905
    %910 = vrot.lane.b32.xlu0 %v572, 98
    %v911 = vpop.permute.xlu0 %910
    %v913 = vmul.f32 %v598, %v911
    %v914 = vmul.f32 %v913, %v591
    %v915 = vadd.f32 %v914, %v606
    %v916 = vld [vmem:[%s13] sm:$0xff]
    %v917 = vld [vmem:[%s13 + $0x8] sm:$0x3]
    %918 = vrot.lane.b32.xlu0 %v54, 98
    %v919 = vpop.permute.xlu0 %918
    %v920 = vsel %vm611, %v919, 0
    %v923 = vsel %vm115, %v917, 0
    %925 = vmatprep.subr.mxu0 0.0
    %926 = vmatpush1.msra.mxu0 %v916
    %927 = vmatprep.subr.mxu0 0.0
    %928 = vmatpush1.msra.mxu0 %v923
    %929 = vmatprep.subr.mxu0 0.0
    %930 = vmatpush1.msra.mxu0 0.0
    %931 = vmatprep.subr.mxu0 0.0
    %932 = vmatpush1.msra.mxu0 0.0
    %933 = vmatprep.subr.mxu0 0.0
    %934 = vmatpush1.msra.mxu0 0.0
    %935 = vmatprep.subr.mxu0 0.0
    %936 = vmatpush1.msra.mxu0 0.0
    %937 = vmatprep.subr.mxu0 0.0
    %938 = vmatpush1.msra.mxu0 0.0
    %939 = vmatprep.subr.mxu0 0.0
    %940 = vmatpush1.msra.mxu0 0.0
    %941 = vmatprep.subr.mxu0 0.0
    %942 = vmatpush1.msra.mxu0 0.0
    %943 = vmatprep.subr.mxu0 0.0
    %944 = vmatpush1.msra.mxu0 0.0
    %945 = vmatprep.subr.mxu0 0.0
    %946 = vmatpush1.msra.mxu0 0.0
    %947 = vmatprep.subr.mxu0 0.0
    %948 = vmatpush1.msra.mxu0 0.0
    %949 = vmatprep.subr.mxu0 0.0
    %950 = vmatpush1.msra.mxu0 0.0
    %951 = vmatprep.subr.mxu0 0.0
    %952 = vmatpush1.msra.mxu0 0.0
    %953 = vmatprep.subr.mxu0 0.0
    %954 = vmatpush1.msra.mxu0 0.0
    %955 = vmatprep.subr.mxu0 0.0
    %956 = vmatpush1.msra.mxu0 0.0
    %957 = vmatprep.subr.mxu0 0.0
    %958 = vmatpush1.msra.mxu0 0.0
    %959 = vmatprep.subr.mxu0 0.0
    %960 = vmatpush1.msra.mxu0 0.0
    %961 = vmatprep.subr.mxu0 0.0
    %962 = vmatpush1.msra.mxu0 0.0
    %963 = vmatprep.subr.mxu0 0.0
    %964 = vmatpush1.msra.mxu0 0.0
    %965 = vmatprep.subr.mxu0 0.0
    %966 = vmatpush1.msra.mxu0 0.0
    %967 = vmatprep.subr.mxu0 0.0
    %968 = vmatpush1.msra.mxu0 0.0
    %969 = vmatprep.subr.mxu0 0.0
    %970 = vmatpush1.msra.mxu0 0.0
    %971 = vmatprep.subr.mxu0 0.0
    %972 = vmatpush1.msra.mxu0 0.0
    %973 = vmatprep.subr.mxu0 0.0
    %974 = vmatpush1.msra.mxu0 0.0
    %975 = vmatprep.subr.mxu0 0.0
    %976 = vmatpush1.msra.mxu0 0.0
    %977 = vmatprep.subr.mxu0 0.0
    %978 = vmatpush1.msra.mxu0 0.0
    %979 = vmatprep.subr.mxu0 0.0
    %980 = vmatpush1.msra.mxu0 0.0
    %981 = vmatprep.subr.mxu0 0.0
    %982 = vmatpush1.msra.mxu0 0.0
    %983 = vmatprep.subr.mxu0 0.0
    %984 = vmatpush1.msra.mxu0 0.0
    %985 = vmatprep.subr.mxu0 0.0
    %986 = vmatpush1.msra.mxu0 0.0
    %987 = vmatprep.subr.mxu0 0.0
    %988 = vmatpush1.msra.mxu0 0.0
    %989 = vmatprep.mubr.f32.mxu0 0.0
    %990 = vmatmul.mubr.f32.gmra.mrb[0].mxu0 %v920
    %v991 = vpop.f32.mrb[0].mxu0
    %v992 = vadd.f32 0.0, %v991
    %v993 = vpop.f32.mrb[0].mxu0
    %994 = vdwg.mxu0
    %v995 = vadd.f32 %v915, %v992
    %v996 = vsel %vm611, %v995, -inf
    %997 = vmax.xlane.f32.xlu0 %v996
    %v998 = vpop.xlane.xlu0 %997
    %v999 = vsub.f32 %v995, %v998
    %v1000 = vmul.f32 %v999, 1.442695
    %v1001 = vpow.pop %v1000
    %v1002 = vsel %vm611, %v1001, 0.0
    %1003 = vadd.xlane.f32.xlu0 %v1002
    %v1004 = vpop.xlane.xlu0 %1003
    %v1005 = vrcp.pop %v1004
    %v1006 = vmul.f32 %v1001, %v1005
    %1008 = vrot.lane.b32.xlu0 %v1006, 30
    %v1009 = vpop.permute.xlu0 %1008
    %vm1011 = vcmask 326896
    %1012 = vst.msk [vmem:[#allocation2] sm:$0xff] %vm1011, %v1009
    %1014 = vrot.lane.b32.xlu0 %v582, 88
    %v1015 = vpop.permute.xlu0 %1014
    %v1017 = vmul.f32 %v598, %v1015
    %v1018 = vmul.f32 %v1017, %v591
    %v1019 = vadd.f32 %v1018, %v606
    %v1020 = vld [vmem:[%s13] sm:$0xff]
    %v1021 = vld [vmem:[%s13 + $0x8] sm:$0x3]
    %1022 = vrot.lane.b32.xlu0 %v54, 88
    %v1023 = vpop.permute.xlu0 %1022
    %v1024 = vsel %vm611, %v1023, 0
    %v1027 = vsel %vm115, %v1021, 0
    %1029 = vmatprep.subr.mxu0 0.0
    %1030 = vmatpush1.msra.mxu0 %v1020
    %1031 = vmatprep.subr.mxu0 0.0
    %1032 = vmatpush1.msra.mxu0 %v1027
    %1033 = vmatprep.subr.mxu0 0.0
    %1034 = vmatpush1.msra.mxu0 0.0
    %1035 = vmatprep.subr.mxu0 0.0
    %1036 = vmatpush1.msra.mxu0 0.0
    %1037 = vmatprep.subr.mxu0 0.0
    %1038 = vmatpush1.msra.mxu0 0.0
    %1039 = vmatprep.subr.mxu0 0.0
    %1040 = vmatpush1.msra.mxu0 0.0
    %1041 = vmatprep.subr.mxu0 0.0
    %1042 = vmatpush1.msra.mxu0 0.0
    %1043 = vmatprep.subr.mxu0 0.0
    %1044 = vmatpush1.msra.mxu0 0.0
    %1045 = vmatprep.subr.mxu0 0.0
    %1046 = vmatpush1.msra.mxu0 0.0
    %1047 = vmatprep.subr.mxu0 0.0
    %1048 = vmatpush1.msra.mxu0 0.0
    %1049 = vmatprep.subr.mxu0 0.0
    %1050 = vmatpush1.msra.mxu0 0.0
    %1051 = vmatprep.subr.mxu0 0.0
    %1052 = vmatpush1.msra.mxu0 0.0
    %1053 = vmatprep.subr.mxu0 0.0
    %1054 = vmatpush1.msra.mxu0 0.0
    %1055 = vmatprep.subr.mxu0 0.0
    %1056 = vmatpush1.msra.mxu0 0.0
    %1057 = vmatprep.subr.mxu0 0.0
    %1058 = vmatpush1.msra.mxu0 0.0
    %1059 = vmatprep.subr.mxu0 0.0
    %1060 = vmatpush1.msra.mxu0 0.0
    %1061 = vmatprep.subr.mxu0 0.0
    %1062 = vmatpush1.msra.mxu0 0.0
    %1063 = vmatprep.subr.mxu0 0.0
    %1064 = vmatpush1.msra.mxu0 0.0
    %1065 = vmatprep.subr.mxu0 0.0
    %1066 = vmatpush1.msra.mxu0 0.0
    %1067 = vmatprep.subr.mxu0 0.0
    %1068 = vmatpush1.msra.mxu0 0.0
    %1069 = vmatprep.subr.mxu0 0.0
    %1070 = vmatpush1.msra.mxu0 0.0
    %1071 = vmatprep.subr.mxu0 0.0
    %1072 = vmatpush1.msra.mxu0 0.0
    %1073 = vmatprep.subr.mxu0 0.0
    %1074 = vmatpush1.msra.mxu0 0.0
    %1075 = vmatprep.subr.mxu0 0.0
    %1076 = vmatpush1.msra.mxu0 0.0
    %1077 = vmatprep.subr.mxu0 0.0
    %1078 = vmatpush1.msra.mxu0 0.0
    %1079 = vmatprep.subr.mxu0 0.0
    %1080 = vmatpush1.msra.mxu0 0.0
    %1081 = vmatprep.subr.mxu0 0.0
    %1082 = vmatpush1.msra.mxu0 0.0
    %1083 = vmatprep.subr.mxu0 0.0
    %1084 = vmatpush1.msra.mxu0 0.0
    %1085 = vmatprep.subr.mxu0 0.0
    %1086 = vmatpush1.msra.mxu0 0.0
    %1087 = vmatprep.subr.mxu0 0.0
    %1088 = vmatpush1.msra.mxu0 0.0
    %1089 = vmatprep.subr.mxu0 0.0
    %1090 = vmatpush1.msra.mxu0 0.0
    %1091 = vmatprep.subr.mxu0 0.0
    %1092 = vmatpush1.msra.mxu0 0.0
    %1093 = vmatprep.mubr.f32.mxu0 0.0
    %1094 = vmatmul.mubr.f32.gmra.mrb[0].mxu0 %v1024
    %v1095 = vpop.f32.mrb[0].mxu0
    %v1096 = vadd.f32 0.0, %v1095
    %v1097 = vpop.f32.mrb[0].mxu0
    %1098 = vdwg.mxu0
    %v1099 = vadd.f32 %v1019, %v1096
    %v1100 = vsel %vm611, %v1099, -inf
    %1101 = vmax.xlane.f32.xlu0 %v1100
    %v1102 = vpop.xlane.xlu0 %1101
    %v1103 = vsub.f32 %v1099, %v1102
    %v1104 = vmul.f32 %v1103, 1.442695
    %v1105 = vpow.pop %v1104
    %v1106 = vsel %vm611, %v1105, 0.0
    %1107 = vadd.xlane.f32.xlu0 %v1106
    %v1108 = vpop.xlane.xlu0 %1107
    %v1109 = vrcp.pop %v1108
    %v1110 = vmul.f32 %v1105, %v1109
    %1112 = vrot.lane.b32.xlu0 %v1110, 40
    %v1113 = vpop.permute.xlu0 %1112
    %vm1115 = vcmask 408896
    %1116 = vst.msk [vmem:[#allocation2] sm:$0xff] %vm1115, %v1113
    // Predicated region
    $region58: #{tpu_custom_call.1} parent=1 // pred_check
      _
    $region59: #{tpu_custom_call.1} parent=1 // pred_check_branch
      %1118 = sbr.rel (0) target = $region61
    $region60: #{tpu_custom_call.1} parent=1 // pred_region
      %s1120 = ssub.s32 128, 128
      %1121 = vsyncadd [#allocation3], %s1120
      %s1123 = sshll.u32 [#allocation2], 4
      %s1124 = int_to_ptr.vmem [resolvable:$true] %s1123
      %1126 = dma.vmem_to_hbm [thread:$0]  %s1124, 128, %s14, [#allocation3]
    $region61: #{tpu_custom_call.1} parent=1 // pred_fallthru
      _
    // Predicated region
    $region62: #{tpu_custom_call.1} parent=1 // pred_check
      _
    $region63: #{tpu_custom_call.1} parent=1 // pred_check_branch
      %1128 = sbr.rel (0) target = $region65
    $region64: #{tpu_custom_call.1} parent=1 // pred_region
      %1129 = dma.done [#allocation3], 128
    $region65: #{tpu_custom_call.1} parent=1 // pred_fallthru
      _
    %1130 = vsyncpa [#allocation3], 1

</llo_original>
